<compile_context>
chip_gen: v6e
topology: v6e:2x2x1
jax: 0.10.0
libtpu: 0.0.40
codegen_flags: <defaults>
</compile_context>

<pallas_src>
import functools

import jax
import jax.numpy as jnp
from jax.experimental import pallas as pl
from jax.experimental.pallas import tpu as pltpu


def _round_up(x, m):
    return ((x + m - 1) // m) * m


def make_rnn_kernel(num_layers, seq_len, batch_padded, batch, hidden):
    """Single-invocation kernel: whole sequence + all weights resident in VMEM."""
    L, T, Bp, B, H = num_layers, seq_len, batch_padded, batch, hidden

    def kernel(*refs):
        x_ref, w_ih0_ref, b0_ref, w_hh0_ref = refs[0:4]
        if L > 1:
            (w_ih_r_ref, w_hh_r_ref, b_r_ref,
             w_fc_ref, b_fc_ref, out_ref) = refs[4:10]
        else:
            w_fc_ref, b_fc_ref, out_ref = refs[4:7]

        # (1) Hoisted layer-0 input projection: one (T*Bp, I) x (I, H) matmul
        #     with (b_ih[0] + b_hh[0]) folded in (single hoisted broadcast).
        #     Rows t*Bp:(t+1)*Bp = time step t, sublane-tile aligned.
        xp = (jnp.dot(x_ref[...], w_ih0_ref[...],
                      preferred_element_type=jnp.float32)
              + b0_ref[...])                                   # (T*Bp, H)

        # Loop-invariant weights & pre-broadcast biases, hoisted out of the
        # recurrence (loaded / broadcast exactly once).
        w_hh0 = w_hh0_ref[...]                                 # (H, H)
        if L > 1:
            w_ih_r = [w_ih_r_ref[l] for l in range(L - 1)]     # each (H, H)
            w_hh_r = [w_hh_r_ref[l] for l in range(L - 1)]     # each (H, H)
            b_r = [jnp.broadcast_to(b_r_ref[l:l + 1, :], (Bp, H))
                   for l in range(L - 1)]                      # each (Bp, H)

        # (2) Recurrence.  T and L are small & static -> fully unrolled; the
        #     hidden state stays in vregs (no per-step VMEM round trip).
        h = [jnp.zeros((Bp, H), jnp.float32) for _ in range(L)]
        inp = h[L - 1]
        for t in range(T):
            # Tile-aligned static slice (Bp is a multiple of 8 sublanes).
            x_t = xp[t * Bp:(t + 1) * Bp, :]                   # (Bp, H)
            h[0] = jnp.tanh(
                x_t + jnp.dot(h[0], w_hh0, preferred_element_type=jnp.float32))
            inp = h[0]
            for l in range(1, L):
                # Un-fused ih/hh: h[l] @ W_hh does not depend on `inp`, so the
                # scheduler can issue it before layer l-1's tanh finishes.
                h[l] = jnp.tanh(
                    jnp.dot(inp, w_ih_r[l - 1],
                            preferred_element_type=jnp.float32)
                    + jnp.dot(h[l], w_hh_r[l - 1],
                              preferred_element_type=jnp.float32)
                    + b_r[l - 1])
                inp = h[l]

        # (3) FC exactly once, on the top layer's final hidden state; store
        #     only the first B (real) batch rows.
        logits = (jnp.dot(inp, w_fc_ref[...], preferred_element_type=jnp.float32)
                  + b_fc_ref[...])                             # (Bp, C)
        out_ref[...] = logits[:B, :]

    return kernel


@functools.partial(jax.jit,
                   static_argnames=("num_layers", "hidden_size", "num_classes"))
def rnn_forward(x, prep, *, num_layers, hidden_size, num_classes):
    B, T, I = x.shape
    H, C, L = hidden_size, num_classes, num_layers
    Bp = _round_up(B, 8)   # sublane-align the batch rows

    # Layout plumbing only (no compute): time-major, pad batch to the 8-row
    # sublane tile, fold (T, Bp) so the layer-0 projection is one big matmul
    # inside the kernel and every per-step slice is tile-aligned.  XLA fuses
    # transpose+pad+reshape into a single copy fusion.
    x_tm = jnp.transpose(x, (1, 0, 2))                         # (T, B, I)
    if Bp != B:
        x_tm = jnp.pad(x_tm, ((0, 0), (0, Bp - B), (0, 0)))    # (T, Bp, I)
    x2 = x_tm.reshape(T * Bp, I)                               # (T*Bp, I)

    kernel = make_rnn_kernel(L, T, Bp, B, H)

    args = [x2, prep["w_ih0"], prep["b0"], prep["w_hh0"]]
    in_specs = [
        pl.BlockSpec((T * Bp, I), lambda i: (0, 0)),           # x (time-major, folded)
        pl.BlockSpec((I, H), lambda i: (0, 0)),                # W_ih layer 0
        pl.BlockSpec((1, H), lambda i: (0, 0)),                # b_ih0 + b_hh0
        pl.BlockSpec((H, H), lambda i: (0, 0)),                # W_hh layer 0
    ]
    if L > 1:
        args += [prep["w_ih_rest"], prep["w_hh_rest"], prep["b_rest"]]
        in_specs += [
            pl.BlockSpec((L - 1, H, H), lambda i: (0, 0, 0)),  # W_ih layers 1..L-1
            pl.BlockSpec((L - 1, H, H), lambda i: (0, 0, 0)),  # W_hh layers 1..L-1
            pl.BlockSpec((L - 1, H), lambda i: (0, 0)),        # summed biases 1..L-1
        ]
    args += [prep["w_fc"], prep["b_fc"]]
    in_specs += [
        pl.BlockSpec((H, C), lambda i: (0, 0)),                # fc weight
        pl.BlockSpec((1, C), lambda i: (0, 0)),                # fc bias
    ]

    return pl.pallas_call(
        kernel,
        out_shape=jax.ShapeDtypeStruct((B, C), jnp.float32),
        grid_spec=pltpu.PrefetchScalarGridSpec(
            num_scalar_prefetch=0,
            grid=(1,),                                         # single invocation
            in_specs=in_specs,
            out_specs=pl.BlockSpec((B, C), lambda i: (0, 0)),
        ),
        compiler_params=pltpu.CompilerParams(
            dimension_semantics=("arbitrary",)),
    )(*args)


def init_params(key, input_size, hidden_size, num_classes, num_layers):
    """Deterministic init mirroring PyTorch's U(-1/sqrt(H), 1/sqrt(H)) scheme."""
    H, I, C, L = hidden_size, input_size, num_classes, num_layers
    k_rnn = 1.0 / jnp.sqrt(jnp.float32(H))
    k_fc = 1.0 / jnp.sqrt(jnp.float32(H))
    keys = jax.random.split(key, 7)

    def u(k, shape, bound):
        return jax.random.uniform(k, shape, jnp.float32, -bound, bound)

    return {
        "w_ih0": u(keys[0], (I, H), k_rnn),
        "w_ih_rest": u(keys[1], (max(L - 1, 1), H, H), k_rnn),
        "w_hh": u(keys[2], (L, H, H), k_rnn),
        "b_ih": u(keys[3], (L, H), k_rnn),
        "b_hh": u(keys[4], (L, H), k_rnn),
        "w_fc": u(keys[5], (H, C), k_fc),
        "b_fc": u(keys[6], (1, C), k_fc),
    }


def prepare_params(params, num_layers):
    """One-time derived-parameter setup (kept out of the per-call forward path)."""
    L = num_layers
    b_sum = params["b_ih"] + params["b_hh"]                    # (L, H)
    prep = {
        "w_ih0": params["w_ih0"],                              # (I, H)
        "b0": b_sum[0:1, :],                                   # (1, H)
        "w_hh0": params["w_hh"][0],                            # (H, H)
        "w_fc": params["w_fc"],                                # (H, C)
        "b_fc": params["b_fc"],                                # (1, C)
    }
    if L > 1:
        prep["w_ih_rest"] = params["w_ih_rest"][:L - 1]        # (L-1, H, H)
        prep["w_hh_rest"] = params["w_hh"][1:]                 # (L-1, H, H)
        prep["b_rest"] = b_sum[1:]                             # (L-1, H)
    return jax.tree_util.tree_map(jnp.asarray, prep)


def rnn_reference(x, params, num_layers, hidden_size):
    """Pure-JAX reference matching torch.nn.RNN(batch_first=True) + Linear."""
    B, T, _ = x.shape
    H = hidden_size
    h = [jnp.zeros((B, H), jnp.float32) for _ in range(num_layers)]
    inp = None
    for t in range(T):
        inp = x[:, t, :]
        for l in range(num_layers):
            w_ih = params["w_ih0"] if l == 0 else params["w_ih_rest"][l - 1]
            h[l] = jnp.tanh(inp @ w_ih + h[l] @ params["w_hh"][l]
                            + params["b_ih"][l] + params["b_hh"][l])
            inp = h[l]
    return inp @ params["w_fc"] + params["b_fc"]


if __name__ == "__main__":
    batch, seq, input_size = 4, 8, 16
    hidden_size, num_classes, num_layers = 32, 10, 2

    key = jax.random.PRNGKey(0)
    kx, kp = jax.random.split(key)
    x = jax.random.normal(kx, (batch, seq, input_size), jnp.float32)
    params = init_params(kp, input_size, hidden_size, num_classes, num_layers)
    prep = prepare_params(params, num_layers)   # one-time derived params

    out = rnn_forward(x, prep, num_layers=num_layers,
                      hidden_size=hidden_size, num_classes=num_classes)
    out = jax.block_until_ready(out)

    ref = rnn_reference(x, params, num_layers, hidden_size)
    assert out.shape == (batch, num_classes)
    assert jnp.allclose(out, ref, rtol=1e-4, atol=1e-4), "mismatch vs JAX reference"

    print("KERNEL_OK")
</pallas_src>

<mosaic_0001>
module attributes {stable_mosaic.version = 11 : i64} {
  func.func @kernel(%arg0: i32, %arg1: memref<64x16xf32, #tpu.memory_space<vmem>>, %arg2: memref<16x32xf32, #tpu.memory_space<vmem>>, %arg3: memref<1x32xf32, #tpu.memory_space<vmem>>, %arg4: memref<32x32xf32, #tpu.memory_space<vmem>>, %arg5: memref<1x32x32xf32, #tpu.memory_space<vmem>>, %arg6: memref<1x32x32xf32, #tpu.memory_space<vmem>>, %arg7: memref<1x32xf32, #tpu.memory_space<vmem>>, %arg8: memref<32x10xf32, #tpu.memory_space<vmem>>, %arg9: memref<1x10xf32, #tpu.memory_space<vmem>>, %arg10: memref<4x10xf32, #tpu.memory_space<vmem>>) attributes {dimension_semantics = [#tpu.dimension_semantics<arbitrary>], iteration_bounds = array<i64: 1>, scalar_prefetch = 0 : i64, scratch_operands = 0 : i64, tpu.core_type = #tpu.core_type<tc>, window_params = [{pipeline_mode = #tpu.pipeline_mode<synchronous>, transform_indices = @transform_0, window_bounds = array<i64: 64, 16>}, {pipeline_mode = #tpu.pipeline_mode<synchronous>, transform_indices = @transform_1, window_bounds = array<i64: 16, 32>}, {pipeline_mode = #tpu.pipeline_mode<synchronous>, transform_indices = @transform_2, window_bounds = array<i64: 1, 32>}, {pipeline_mode = #tpu.pipeline_mode<synchronous>, transform_indices = @transform_3, window_bounds = array<i64: 32, 32>}, {pipeline_mode = #tpu.pipeline_mode<synchronous>, transform_indices = @transform_4, window_bounds = array<i64: 1, 32, 32>}, {pipeline_mode = #tpu.pipeline_mode<synchronous>, transform_indices = @transform_5, window_bounds = array<i64: 1, 32, 32>}, {pipeline_mode = #tpu.pipeline_mode<synchronous>, transform_indices = @transform_6, window_bounds = array<i64: 1, 32>}, {pipeline_mode = #tpu.pipeline_mode<synchronous>, transform_indices = @transform_7, window_bounds = array<i64: 32, 10>}, {pipeline_mode = #tpu.pipeline_mode<synchronous>, transform_indices = @transform_8, window_bounds = array<i64: 1, 10>}, {pipeline_mode = #tpu.pipeline_mode<synchronous>, transform_indices = @transform_9, window_bounds = array<i64: 4, 10>}]} {
    %c0 = arith.constant 0 : index
    %c0_0 = arith.constant 0 : index
    %0 = vector.load %arg1[%c0, %c0_0] : memref<64x16xf32, #tpu.memory_space<vmem>>, vector<64x16xf32>
    %c0_1 = arith.constant 0 : index
    %c0_2 = arith.constant 0 : index
    %1 = vector.load %arg2[%c0_1, %c0_2] : memref<16x32xf32, #tpu.memory_space<vmem>>, vector<16x32xf32>
    %cst = arith.constant dense<0.000000e+00> : vector<64x32xf32>
    %2 = tpu.matmul %0, %1, %cst {dimension_numbers = #tpu.dot_dimension_numbers<[1], [0], [0], [1], [0, 0, 1, 1], [], []>} : vector<64x16xf32>, vector<16x32xf32>, vector<64x32xf32> -> vector<64x32xf32>
    %c0_3 = arith.constant 0 : index
    %c0_4 = arith.constant 0 : index
    %3 = vector.load %arg3[%c0_3, %c0_4] : memref<1x32xf32, #tpu.memory_space<vmem>>, vector<1x32xf32>
    %4 = vector.broadcast %3 : vector<1x32xf32> to vector<64x32xf32>
    %5 = arith.addf %2, %4 : vector<64x32xf32>
    %c0_5 = arith.constant 0 : index
    %c0_6 = arith.constant 0 : index
    %6 = vector.load %arg4[%c0_5, %c0_6] : memref<32x32xf32, #tpu.memory_space<vmem>>, vector<32x32xf32>
    %c0_7 = arith.constant 0 : index
    %c0_8 = arith.constant 0 : index
    %c0_9 = arith.constant 0 : index
    %7 = vector.load %arg5[%c0_7, %c0_8, %c0_9] : memref<1x32x32xf32, #tpu.memory_space<vmem>>, vector<1x32x32xf32>
    %8 = vector.shape_cast %7 : vector<1x32x32xf32> to vector<32x32xf32>
    %c0_10 = arith.constant 0 : index
    %c0_11 = arith.constant 0 : index
    %c0_12 = arith.constant 0 : index
    %9 = vector.load %arg6[%c0_10, %c0_11, %c0_12] : memref<1x32x32xf32, #tpu.memory_space<vmem>>, vector<1x32x32xf32>
    %10 = vector.shape_cast %9 : vector<1x32x32xf32> to vector<32x32xf32>
    %c0_13 = arith.constant 0 : index
    %c0_14 = arith.constant 0 : index
    %11 = vector.load %arg7[%c0_13, %c0_14] : memref<1x32xf32, #tpu.memory_space<vmem>>, vector<1x32xf32>
    %12 = vector.shape_cast %11 : vector<1x32xf32> to vector<1x32xf32>
    %13 = vector.broadcast %12 : vector<1x32xf32> to vector<8x32xf32>
    %cst_15 = arith.constant 0.000000e+00 : f32
    %14 = vector.broadcast %cst_15 : f32 to vector<8x32xf32>
    %cst_16 = arith.constant 0.000000e+00 : f32
    %15 = vector.broadcast %cst_16 : f32 to vector<8x32xf32>
    %16 = vector.extract_strided_slice %5 {offsets = [0, 0], sizes = [8, 32], strides = [1, 1]} : vector<64x32xf32> to vector<8x32xf32>
    %cst_17 = arith.constant dense<0.000000e+00> : vector<8x32xf32>
    %17 = tpu.matmul %14, %6, %cst_17 {dimension_numbers = #tpu.dot_dimension_numbers<[1], [0], [0], [1], [0, 0, 1, 1], [], []>} : vector<8x32xf32>, vector<32x32xf32>, vector<8x32xf32> -> vector<8x32xf32>
    %18 = arith.addf %16, %17 : vector<8x32xf32>
    %19 = math.tanh %18 : vector<8x32xf32>
    %cst_18 = arith.constant dense<0.000000e+00> : vector<8x32xf32>
    %20 = tpu.matmul %19, %8, %cst_18 {dimension_numbers = #tpu.dot_dimension_numbers<[1], [0], [0], [1], [0, 0, 1, 1], [], []>} : vector<8x32xf32>, vector<32x32xf32>, vector<8x32xf32> -> vector<8x32xf32>
    %cst_19 = arith.constant dense<0.000000e+00> : vector<8x32xf32>
    %21 = tpu.matmul %15, %10, %cst_19 {dimension_numbers = #tpu.dot_dimension_numbers<[1], [0], [0], [1], [0, 0, 1, 1], [], []>} : vector<8x32xf32>, vector<32x32xf32>, vector<8x32xf32> -> vector<8x32xf32>
    %22 = arith.addf %20, %21 : vector<8x32xf32>
    %23 = arith.addf %22, %13 : vector<8x32xf32>
    %24 = math.tanh %23 : vector<8x32xf32>
    %25 = vector.extract_strided_slice %5 {offsets = [8, 0], sizes = [8, 32], strides = [1, 1]} : vector<64x32xf32> to vector<8x32xf32>
    %cst_20 = arith.constant dense<0.000000e+00> : vector<8x32xf32>
    %26 = tpu.matmul %19, %6, %cst_20 {dimension_numbers = #tpu.dot_dimension_numbers<[1], [0], [0], [1], [0, 0, 1, 1], [], []>} : vector<8x32xf32>, vector<32x32xf32>, vector<8x32xf32> -> vector<8x32xf32>
    %27 = arith.addf %25, %26 : vector<8x32xf32>
    %28 = math.tanh %27 : vector<8x32xf32>
    %cst_21 = arith.constant dense<0.000000e+00> : vector<8x32xf32>
    %29 = tpu.matmul %28, %8, %cst_21 {dimension_numbers = #tpu.dot_dimension_numbers<[1], [0], [0], [1], [0, 0, 1, 1], [], []>} : vector<8x32xf32>, vector<32x32xf32>, vector<8x32xf32> -> vector<8x32xf32>
    %cst_22 = arith.constant dense<0.000000e+00> : vector<8x32xf32>
    %30 = tpu.matmul %24, %10, %cst_22 {dimension_numbers = #tpu.dot_dimension_numbers<[1], [0], [0], [1], [0, 0, 1, 1], [], []>} : vector<8x32xf32>, vector<32x32xf32>, vector<8x32xf32> -> vector<8x32xf32>
    %31 = arith.addf %29, %30 : vector<8x32xf32>
    %32 = arith.addf %31, %13 : vector<8x32xf32>
    %33 = math.tanh %32 : vector<8x32xf32>
    %34 = vector.extract_strided_slice %5 {offsets = [16, 0], sizes = [8, 32], strides = [1, 1]} : vector<64x32xf32> to vector<8x32xf32>
    %cst_23 = arith.constant dense<0.000000e+00> : vector<8x32xf32>
    %35 = tpu.matmul %28, %6, %cst_23 {dimension_numbers = #tpu.dot_dimension_numbers<[1], [0], [0], [1], [0, 0, 1, 1], [], []>} : vector<8x32xf32>, vector<32x32xf32>, vector<8x32xf32> -> vector<8x32xf32>
    %36 = arith.addf %34, %35 : vector<8x32xf32>
    %37 = math.tanh %36 : vector<8x32xf32>
    %cst_24 = arith.constant dense<0.000000e+00> : vector<8x32xf32>
    %38 = tpu.matmul %37, %8, %cst_24 {dimension_numbers = #tpu.dot_dimension_numbers<[1], [0], [0], [1], [0, 0, 1, 1], [], []>} : vector<8x32xf32>, vector<32x32xf32>, vector<8x32xf32> -> vector<8x32xf32>
    %cst_25 = arith.constant dense<0.000000e+00> : vector<8x32xf32>
    %39 = tpu.matmul %33, %10, %cst_25 {dimension_numbers = #tpu.dot_dimension_numbers<[1], [0], [0], [1], [0, 0, 1, 1], [], []>} : vector<8x32xf32>, vector<32x32xf32>, vector<8x32xf32> -> vector<8x32xf32>
    %40 = arith.addf %38, %39 : vector<8x32xf32>
    %41 = arith.addf %40, %13 : vector<8x32xf32>
    %42 = math.tanh %41 : vector<8x32xf32>
    %43 = vector.extract_strided_slice %5 {offsets = [24, 0], sizes = [8, 32], strides = [1, 1]} : vector<64x32xf32> to vector<8x32xf32>
    %cst_26 = arith.constant dense<0.000000e+00> : vector<8x32xf32>
    %44 = tpu.matmul %37, %6, %cst_26 {dimension_numbers = #tpu.dot_dimension_numbers<[1], [0], [0], [1], [0, 0, 1, 1], [], []>} : vector<8x32xf32>, vector<32x32xf32>, vector<8x32xf32> -> vector<8x32xf32>
    %45 = arith.addf %43, %44 : vector<8x32xf32>
    %46 = math.tanh %45 : vector<8x32xf32>
    %cst_27 = arith.constant dense<0.000000e+00> : vector<8x32xf32>
    %47 = tpu.matmul %46, %8, %cst_27 {dimension_numbers = #tpu.dot_dimension_numbers<[1], [0], [0], [1], [0, 0, 1, 1], [], []>} : vector<8x32xf32>, vector<32x32xf32>, vector<8x32xf32> -> vector<8x32xf32>
    %cst_28 = arith.constant dense<0.000000e+00> : vector<8x32xf32>
    %48 = tpu.matmul %42, %10, %cst_28 {dimension_numbers = #tpu.dot_dimension_numbers<[1], [0], [0], [1], [0, 0, 1, 1], [], []>} : vector<8x32xf32>, vector<32x32xf32>, vector<8x32xf32> -> vector<8x32xf32>
    %49 = arith.addf %47, %48 : vector<8x32xf32>
    %50 = arith.addf %49, %13 : vector<8x32xf32>
    %51 = math.tanh %50 : vector<8x32xf32>
    %52 = vector.extract_strided_slice %5 {offsets = [32, 0], sizes = [8, 32], strides = [1, 1]} : vector<64x32xf32> to vector<8x32xf32>
    %cst_29 = arith.constant dense<0.000000e+00> : vector<8x32xf32>
    %53 = tpu.matmul %46, %6, %cst_29 {dimension_numbers = #tpu.dot_dimension_numbers<[1], [0], [0], [1], [0, 0, 1, 1], [], []>} : vector<8x32xf32>, vector<32x32xf32>, vector<8x32xf32> -> vector<8x32xf32>
    %54 = arith.addf %52, %53 : vector<8x32xf32>
    %55 = math.tanh %54 : vector<8x32xf32>
    %cst_30 = arith.constant dense<0.000000e+00> : vector<8x32xf32>
    %56 = tpu.matmul %55, %8, %cst_30 {dimension_numbers = #tpu.dot_dimension_numbers<[1], [0], [0], [1], [0, 0, 1, 1], [], []>} : vector<8x32xf32>, vector<32x32xf32>, vector<8x32xf32> -> vector<8x32xf32>
    %cst_31 = arith.constant dense<0.000000e+00> : vector<8x32xf32>
    %57 = tpu.matmul %51, %10, %cst_31 {dimension_numbers = #tpu.dot_dimension_numbers<[1], [0], [0], [1], [0, 0, 1, 1], [], []>} : vector<8x32xf32>, vector<32x32xf32>, vector<8x32xf32> -> vector<8x32xf32>
    %58 = arith.addf %56, %57 : vector<8x32xf32>
    %59 = arith.addf %58, %13 : vector<8x32xf32>
    %60 = math.tanh %59 : vector<8x32xf32>
    %61 = vector.extract_strided_slice %5 {offsets = [40, 0], sizes = [8, 32], strides = [1, 1]} : vector<64x32xf32> to vector<8x32xf32>
    %cst_32 = arith.constant dense<0.000000e+00> : vector<8x32xf32>
    %62 = tpu.matmul %55, %6, %cst_32 {dimension_numbers = #tpu.dot_dimension_numbers<[1], [0], [0], [1], [0, 0, 1, 1], [], []>} : vector<8x32xf32>, vector<32x32xf32>, vector<8x32xf32> -> vector<8x32xf32>
    %63 = arith.addf %61, %62 : vector<8x32xf32>
    %64 = math.tanh %63 : vector<8x32xf32>
    %cst_33 = arith.constant dense<0.000000e+00> : vector<8x32xf32>
    %65 = tpu.matmul %64, %8, %cst_33 {dimension_numbers = #tpu.dot_dimension_numbers<[1], [0], [0], [1], [0, 0, 1, 1], [], []>} : vector<8x32xf32>, vector<32x32xf32>, vector<8x32xf32> -> vector<8x32xf32>
    %cst_34 = arith.constant dense<0.000000e+00> : vector<8x32xf32>
    %66 = tpu.matmul %60, %10, %cst_34 {dimension_numbers = #tpu.dot_dimension_numbers<[1], [0], [0], [1], [0, 0, 1, 1], [], []>} : vector<8x32xf32>, vector<32x32xf32>, vector<8x32xf32> -> vector<8x32xf32>
    %67 = arith.addf %65, %66 : vector<8x32xf32>
    %68 = arith.addf %67, %13 : vector<8x32xf32>
    %69 = math.tanh %68 : vector<8x32xf32>
    %70 = vector.extract_strided_slice %5 {offsets = [48, 0], sizes = [8, 32], strides = [1, 1]} : vector<64x32xf32> to vector<8x32xf32>
    %cst_35 = arith.constant dense<0.000000e+00> : vector<8x32xf32>
    %71 = tpu.matmul %64, %6, %cst_35 {dimension_numbers = #tpu.dot_dimension_numbers<[1], [0], [0], [1], [0, 0, 1, 1], [], []>} : vector<8x32xf32>, vector<32x32xf32>, vector<8x32xf32> -> vector<8x32xf32>
    %72 = arith.addf %70, %71 : vector<8x32xf32>
    %73 = math.tanh %72 : vector<8x32xf32>
    %cst_36 = arith.constant dense<0.000000e+00> : vector<8x32xf32>
    %74 = tpu.matmul %73, %8, %cst_36 {dimension_numbers = #tpu.dot_dimension_numbers<[1], [0], [0], [1], [0, 0, 1, 1], [], []>} : vector<8x32xf32>, vector<32x32xf32>, vector<8x32xf32> -> vector<8x32xf32>
    %cst_37 = arith.constant dense<0.000000e+00> : vector<8x32xf32>
    %75 = tpu.matmul %69, %10, %cst_37 {dimension_numbers = #tpu.dot_dimension_numbers<[1], [0], [0], [1], [0, 0, 1, 1], [], []>} : vector<8x32xf32>, vector<32x32xf32>, vector<8x32xf32> -> vector<8x32xf32>
    %76 = arith.addf %74, %75 : vector<8x32xf32>
    %77 = arith.addf %76, %13 : vector<8x32xf32>
    %78 = math.tanh %77 : vector<8x32xf32>
    %79 = vector.extract_strided_slice %5 {offsets = [56, 0], sizes = [8, 32], strides = [1, 1]} : vector<64x32xf32> to vector<8x32xf32>
    %cst_38 = arith.constant dense<0.000000e+00> : vector<8x32xf32>
    %80 = tpu.matmul %73, %6, %cst_38 {dimension_numbers = #tpu.dot_dimension_numbers<[1], [0], [0], [1], [0, 0, 1, 1], [], []>} : vector<8x32xf32>, vector<32x32xf32>, vector<8x32xf32> -> vector<8x32xf32>
    %81 = arith.addf %79, %80 : vector<8x32xf32>
    %82 = math.tanh %81 : vector<8x32xf32>
    %cst_39 = arith.constant dense<0.000000e+00> : vector<8x32xf32>
    %83 = tpu.matmul %82, %8, %cst_39 {dimension_numbers = #tpu.dot_dimension_numbers<[1], [0], [0], [1], [0, 0, 1, 1], [], []>} : vector<8x32xf32>, vector<32x32xf32>, vector<8x32xf32> -> vector<8x32xf32>
    %cst_40 = arith.constant dense<0.000000e+00> : vector<8x32xf32>
    %84 = tpu.matmul %78, %10, %cst_40 {dimension_numbers = #tpu.dot_dimension_numbers<[1], [0], [0], [1], [0, 0, 1, 1], [], []>} : vector<8x32xf32>, vector<32x32xf32>, vector<8x32xf32> -> vector<8x32xf32>
    %85 = arith.addf %83, %84 : vector<8x32xf32>
    %86 = arith.addf %85, %13 : vector<8x32xf32>
    %87 = math.tanh %86 : vector<8x32xf32>
    %c0_41 = arith.constant 0 : index
    %c0_42 = arith.constant 0 : index
    %88 = vector.load %arg8[%c0_41, %c0_42] : memref<32x10xf32, #tpu.memory_space<vmem>>, vector<32x10xf32>
    %cst_43 = arith.constant dense<0.000000e+00> : vector<8x10xf32>
    %89 = tpu.matmul %87, %88, %cst_43 {dimension_numbers = #tpu.dot_dimension_numbers<[1], [0], [0], [1], [0, 0, 1, 1], [], []>} : vector<8x32xf32>, vector<32x10xf32>, vector<8x10xf32> -> vector<8x10xf32>
    %c0_44 = arith.constant 0 : index
    %c0_45 = arith.constant 0 : index
    %90 = vector.load %arg9[%c0_44, %c0_45] : memref<1x10xf32, #tpu.memory_space<vmem>>, vector<1x10xf32>
    %91 = vector.broadcast %90 : vector<1x10xf32> to vector<8x10xf32>
    %92 = arith.addf %89, %91 : vector<8x10xf32>
    %93 = vector.extract_strided_slice %92 {offsets = [0, 0], sizes = [4, 10], strides = [1, 1]} : vector<8x10xf32> to vector<4x10xf32>
    %c0_46 = arith.constant 0 : index
    %c0_47 = arith.constant 0 : index
    %94 = vector.load %arg10[%c0_46, %c0_47] : memref<4x10xf32, #tpu.memory_space<vmem>>, vector<4x10xf32>
    tpu.vector_store %arg10[%c0_46, %c0_47], %93 {strides = array<i32>} : memref<4x10xf32, #tpu.memory_space<vmem>>, vector<4x10xf32>,
    return
  }
  func.func @transform_0(%arg0: i32) -> (i32, i32) {
    %c0_i32 = arith.constant 0 : i32
    %c0_i32_0 = arith.constant 0 : i32
    %c0_i32_1 = arith.constant 0 : i32
    return %c0_i32, %c0_i32_0 : i32, i32
  }
  func.func @transform_1(%arg0: i32) -> (i32, i32) {
    %c0_i32 = arith.constant 0 : i32
    %c0_i32_0 = arith.constant 0 : i32
    %c0_i32_1 = arith.constant 0 : i32
    return %c0_i32, %c0_i32_0 : i32, i32
  }
  func.func @transform_2(%arg0: i32) -> (i32, i32) {
    %c0_i32 = arith.constant 0 : i32
    %c0_i32_0 = arith.constant 0 : i32
    %c0_i32_1 = arith.constant 0 : i32
    return %c0_i32, %c0_i32_0 : i32, i32
  }
  func.func @transform_3(%arg0: i32) -> (i32, i32) {
    %c0_i32 = arith.constant 0 : i32
    %c0_i32_0 = arith.constant 0 : i32
    %c0_i32_1 = arith.constant 0 : i32
    return %c0_i32, %c0_i32_0 : i32, i32
  }
  func.func @transform_4(%arg0: i32) -> (i32, i32, i32) {
    %c0_i32 = arith.constant 0 : i32
    %c0_i32_0 = arith.constant 0 : i32
    %c0_i32_1 = arith.constant 0 : i32
    %c0_i32_2 = arith.constant 0 : i32
    return %c0_i32, %c0_i32_0, %c0_i32_1 : i32, i32, i32
  }
  func.func @transform_5(%arg0: i32) -> (i32, i32, i32) {
    %c0_i32 = arith.constant 0 : i32
    %c0_i32_0 = arith.constant 0 : i32
    %c0_i32_1 = arith.constant 0 : i32
    %c0_i32_2 = arith.constant 0 : i32
    return %c0_i32, %c0_i32_0, %c0_i32_1 : i32, i32, i32
  }
  func.func @transform_6(%arg0: i32) -> (i32, i32) {
    %c0_i32 = arith.constant 0 : i32
    %c0_i32_0 = arith.constant 0 : i32
    %c0_i32_1 = arith.constant 0 : i32
    return %c0_i32, %c0_i32_0 : i32, i32
  }
  func.func @transform_7(%arg0: i32) -> (i32, i32) {
    %c0_i32 = arith.constant 0 : i32
    %c0_i32_0 = arith.constant 0 : i32
    %c0_i32_1 = arith.constant 0 : i32
    return %c0_i32, %c0_i32_0 : i32, i32
  }
  func.func @transform_8(%arg0: i32) -> (i32, i32) {
    %c0_i32 = arith.constant 0 : i32
    %c0_i32_0 = arith.constant 0 : i32
    %c0_i32_1 = arith.constant 0 : i32
    return %c0_i32, %c0_i32_0 : i32, i32
  }
  func.func @transform_9(%arg0: i32) -> (i32, i32) {
    %c0_i32 = arith.constant 0 : i32
    %c0_i32_0 = arith.constant 0 : i32
    %c0_i32_1 = arith.constant 0 : i32
    return %c0_i32, %c0_i32_0 : i32, i32
  }
}

</mosaic_0001>

<llo_original>
// kernel: rnn_forward.1
$region0: #{rnn_forward.1}
  #allocation0 [shape = 'u32[]', space=smem, size = 0x4, offset = 0x4, fixed_abs, tag = 'smem constant byte address 0x4 - core index']
  #allocation1 [shape = 'u32[144,128]{1,0:T(1,128)}', space=vmem, size = 0x12000, scoped, tag = 'internal scratch']
  %s0 = inlined_call_operand.vmem [shape: f32[64,16], index: 0, kind: input, shape index: {}]
  %s1 = inlined_call_operand.vmem [shape: f32[16,32], index: 1, kind: input, shape index: {}]
  %s2 = inlined_call_operand.vmem [shape: f32[1,32], index: 2, kind: input, shape index: {}]
  %s3 = inlined_call_operand.vmem [shape: f32[32,32], index: 3, kind: input, shape index: {}]
  %s4 = inlined_call_operand.vmem [shape: f32[1,32,32], index: 4, kind: input, shape index: {}]
  %s5 = inlined_call_operand.vmem [shape: f32[1,32,32], index: 5, kind: input, shape index: {}]
  %s6 = inlined_call_operand.vmem [shape: f32[1,32], index: 6, kind: input, shape index: {}]
  %s7 = inlined_call_operand.vmem [shape: f32[32,10], index: 7, kind: input, shape index: {}]
  %s8 = inlined_call_operand.vmem [shape: f32[1,10], index: 8, kind: input, shape index: {}]
  %s9 = inlined_call_operand.hbm [shape: f32[4,10], index: 9, kind: output, shape index: {}]
  %s10 = sld [smem:[#allocation0]]
  $region46: #{rnn_forward.1} parent=0
    _
  %s12 = ssub.s32 1, %s10
  %s13 = scalar_select 0, %s12, %s10
  $region1: #{rnn_forward.1} parent=0
    #allocation2 [shape = 'u8[2048]{0}', space=vmem, size = 0x800, scoped, tag = 'output window, operand 0, single buffered']
    #allocation3 [shape = 's32[1]{0}', space=sflag, size = 0x4, scoped, tag = 'scoped memory for rnn_forward.1']
    %14 = vsyncpa [#allocation3], 0
    // Predicated region
    $region2: #{rnn_forward.1} parent=1 // pred_check
      _
    $region3: #{rnn_forward.1} parent=1 // pred_check_branch
      %16 = sbr.rel (0) target = $region5
    $region4: #{rnn_forward.1} parent=1 // pred_region
      _
    $region5: #{rnn_forward.1} parent=1 // pred_fallthru
      _
    // Predicated region
    $region6: #{rnn_forward.1} parent=1 // pred_check
      _
    $region7: #{rnn_forward.1} parent=1 // pred_check_branch
      %18 = sbr.rel (0) target = $region9
    $region8: #{rnn_forward.1} parent=1 // pred_region
      _
    $region9: #{rnn_forward.1} parent=1 // pred_fallthru
      _
    // Predicated region
    $region10: #{rnn_forward.1} parent=1 // pred_check
      _
    $region11: #{rnn_forward.1} parent=1 // pred_check_branch
      %20 = sbr.rel (0) target = $region13
    $region12: #{rnn_forward.1} parent=1 // pred_region
      _
    $region13: #{rnn_forward.1} parent=1 // pred_fallthru
      _
    // Predicated region
    $region14: #{rnn_forward.1} parent=1 // pred_check
      _
    $region15: #{rnn_forward.1} parent=1 // pred_check_branch
      %22 = sbr.rel (0) target = $region17
    $region16: #{rnn_forward.1} parent=1 // pred_region
      _
    $region17: #{rnn_forward.1} parent=1 // pred_fallthru
      _
    // Predicated region
    $region18: #{rnn_forward.1} parent=1 // pred_check
      _
    $region19: #{rnn_forward.1} parent=1 // pred_check_branch
      %24 = sbr.rel (0) target = $region21
    $region20: #{rnn_forward.1} parent=1 // pred_region
      _
    $region21: #{rnn_forward.1} parent=1 // pred_fallthru
      _
    // Predicated region
    $region22: #{rnn_forward.1} parent=1 // pred_check
      _
    $region23: #{rnn_forward.1} parent=1 // pred_check_branch
      %26 = sbr.rel (0) target = $region25
    $region24: #{rnn_forward.1} parent=1 // pred_region
      _
    $region25: #{rnn_forward.1} parent=1 // pred_fallthru
      _
    // Predicated region
    $region26: #{rnn_forward.1} parent=1 // pred_check
      _
    $region27: #{rnn_forward.1} parent=1 // pred_check_branch
      %28 = sbr.rel (0) target = $region29
    $region28: #{rnn_forward.1} parent=1 // pred_region
      _
    $region29: #{rnn_forward.1} parent=1 // pred_fallthru
      _
    // Predicated region
    $region30: #{rnn_forward.1} parent=1 // pred_check
      _
    $region31: #{rnn_forward.1} parent=1 // pred_check_branch
      %30 = sbr.rel (0) target = $region33
    $region32: #{rnn_forward.1} parent=1 // pred_region
      _
    $region33: #{rnn_forward.1} parent=1 // pred_fallthru
      _
    // Predicated region
    $region34: #{rnn_forward.1} parent=1 // pred_check
      _
    $region35: #{rnn_forward.1} parent=1 // pred_check_branch
      %32 = sbr.rel (0) target = $region37
    $region36: #{rnn_forward.1} parent=1 // pred_region
      _
    $region37: #{rnn_forward.1} parent=1 // pred_fallthru
      _
    %v33 = vld [vmem:[%s0] sm:$0xff]
    %v34 = vld [vmem:[%s0 + $0x8] sm:$0xff]
    %v35 = vld [vmem:[%s0 + $0x10] sm:$0xff]
    %v36 = vld [vmem:[%s0 + $0x18] sm:$0xff]
    %v37 = vld [vmem:[%s0 + $0x20] sm:$0xff]
    %v38 = vld [vmem:[%s0 + $0x28] sm:$0xff]
    %v39 = vld [vmem:[%s0 + $0x30] sm:$0xff]
    %v40 = vld [vmem:[%s0 + $0x38] sm:$0xff]
    %v41 = vld [vmem:[%s1] sm:$0xff]
    %v42 = vld [vmem:[%s1 + $0x8] sm:$0xff]
    %v43 = vld [vmem:[%s2] sm:$0x1]
    %v45 = vlaneseq
    %v46 = vshrl.u32 %v45, 7
    %v47 = vsub.s32 0, %v46
    %v48 = vrot.slane %v43, %v47
    %vm50 = vcmask 130048
    %v52 = vsel %vm50, %v33, 0
    %v55 = vsel %vm50, %v34, 0
    %v58 = vsel %vm50, %v35, 0
    %v61 = vsel %vm50, %v36, 0
    %v64 = vsel %vm50, %v37, 0
    %v67 = vsel %vm50, %v38, 0
    %v70 = vsel %vm50, %v39, 0
    %v73 = vsel %vm50, %v40, 0
    %75 = vmatprep.subr.mxu0 0.0
    %76 = vmatpush1.msra.mxu0 0.0
    %77 = vmatprep.subr.mxu0 0.0
    %78 = vmatpush1.msra.mxu0 0.0
    %79 = vmatprep.subr.mxu0 0.0
    %80 = vmatpush1.msra.mxu0 0.0
    %81 = vmatprep.subr.mxu0 0.0
    %82 = vmatpush1.msra.mxu0 0.0
    %83 = vmatprep.subr.mxu0 0.0
    %84 = vmatpush1.msra.mxu0 0.0
    %85 = vmatprep.subr.mxu0 0.0
    %86 = vmatpush1.msra.mxu0 0.0
    %87 = vmatprep.subr.mxu0 0.0
    %88 = vmatpush1.msra.mxu0 0.0
    %89 = vmatprep.subr.mxu0 0.0
    %90 = vmatpush1.msra.mxu0 0.0
    %91 = vmatprep.subr.mxu0 0.0
    %92 = vmatpush1.msra.mxu0 0.0
    %93 = vmatprep.subr.mxu0 0.0
    %94 = vmatpush1.msra.mxu0 0.0
    %95 = vmatprep.subr.mxu0 0.0
    %96 = vmatpush1.msra.mxu0 0.0
    %97 = vmatprep.subr.mxu0 0.0
    %98 = vmatpush1.msra.mxu0 0.0
    %99 = vmatprep.subr.mxu0 0.0
    %100 = vmatpush1.msra.mxu0 0.0
    %101 = vmatprep.subr.mxu0 0.0
    %102 = vmatpush1.msra.mxu0 0.0
    %103 = vmatprep.subr.mxu0 0.0
    %104 = vmatpush1.msra.mxu0 %v42
    %105 = vmatprep.subr.mxu0 0.0
    %106 = vmatpush1.msra.mxu0 %v41
    %107 = vmatprep.subr.mxu0 0.0
    %108 = vmatpush2.msra.mxu0 0.0
    %109 = vmatprep.subr.mxu0 0.0
    %110 = vmatpush2.msra.mxu0 0.0
    %111 = vmatprep.subr.mxu0 0.0
    %112 = vmatpush2.msra.mxu0 0.0
    %113 = vmatprep.subr.mxu0 0.0
    %114 = vmatpush2.msra.mxu0 0.0
    %115 = vmatprep.subr.mxu0 0.0
    %116 = vmatpush2.msra.mxu0 0.0
    %117 = vmatprep.subr.mxu0 0.0
    %118 = vmatpush2.msra.mxu0 0.0
    %119 = vmatprep.subr.mxu0 0.0
    %120 = vmatpush2.msra.mxu0 0.0
    %121 = vmatprep.subr.mxu0 0.0
    %122 = vmatpush2.msra.mxu0 0.0
    %123 = vmatprep.subr.mxu0 0.0
    %124 = vmatpush2.msra.mxu0 0.0
    %125 = vmatprep.subr.mxu0 0.0
    %126 = vmatpush2.msra.mxu0 0.0
    %127 = vmatprep.subr.mxu0 0.0
    %128 = vmatpush2.msra.mxu0 0.0
    %129 = vmatprep.subr.mxu0 0.0
    %130 = vmatpush2.msra.mxu0 0.0
    %131 = vmatprep.subr.mxu0 0.0
    %132 = vmatpush2.msra.mxu0 0.0
    %133 = vmatprep.subr.mxu0 0.0
    %134 = vmatpush2.msra.mxu0 0.0
    %135 = vmatprep.subr.mxu0 0.0
    %136 = vmatpush2.msra.mxu0 0.0
    %137 = vmatprep.subr.mxu0 0.0
    %138 = vmatpush2.msra.mxu0 0.0
    %139 = vmatprep.mubr.f32.mxu0 0.0
    %140 = vmatmul.mubr.f32.gmra.mxu0 %v52
    %v141 = vpop.f32.mrf.mxu0
    %v142 = vadd.f32 %v48, %v141
    %v143 = vpop.f32.mrf.mxu0
    %144 = vmatprep.mubr.f32.mxu0 0.0
    %145 = vmatmul.mubr.f32.gmra.mxu0 %v55
    %v146 = vpop.f32.mrf.mxu0
    %v147 = vadd.f32 %v48, %v146
    %v148 = vpop.f32.mrf.mxu0
    %149 = vmatprep.mubr.f32.mxu0 0.0
    %150 = vmatmul.mubr.f32.gmra.mxu0 %v58
    %v151 = vpop.f32.mrf.mxu0
    %v152 = vadd.f32 %v48, %v151
    %v153 = vpop.f32.mrf.mxu0
    %154 = vmatprep.mubr.f32.mxu0 0.0
    %155 = vmatmul.mubr.f32.gmra.mxu0 %v61
    %v156 = vpop.f32.mrf.mxu0
    %v157 = vadd.f32 %v48, %v156
    %v158 = vpop.f32.mrf.mxu0
    %159 = vmatprep.mubr.f32.mxu0 0.0
    %160 = vmatmul.mubr.f32.gmra.mxu0 %v64
    %v161 = vpop.f32.mrf.mxu0
    %v162 = vadd.f32 %v48, %v161
    %v163 = vpop.f32.mrf.mxu0
    %164 = vmatprep.mubr.f32.mxu0 0.0
    %165 = vmatmul.mubr.f32.gmra.mxu0 %v67
    %v166 = vpop.f32.mrf.mxu0
    %v167 = vadd.f32 %v48, %v166
    %v168 = vpop.f32.mrf.mxu0
    %169 = vmatprep.mubr.f32.mxu0 0.0
    %170 = vmatmul.mubr.f32.gmra.mxu0 %v70
    %v171 = vpop.f32.mrf.mxu0
    %v172 = vadd.f32 %v48, %v171
    %v173 = vpop.f32.mrf.mxu0
    %174 = vmatprep.mubr.f32.mxu0 0.0
    %175 = vmatmul.mubr.f32.gmra.mxu0 %v73
    %v176 = vpop.f32.mrf.mxu0
    %v177 = vadd.f32 %v48, %v176
    %v178 = vpop.f32.mrf.mxu0
    %179 = vdwg.mxu0
    %v180 = vld [vmem:[%s3] sm:$0xff]
    %v181 = vld [vmem:[%s3 + $0x8] sm:$0xff]
    %v182 = vld [vmem:[%s3 + $0x10] sm:$0xff]
    %v183 = vld [vmem:[%s3 + $0x18] sm:$0xff]
    %v184 = vld [vmem:[%s4] sm:$0xff]
    %v185 = vld [vmem:[%s4 + $0x8] sm:$0xff]
    %v186 = vld [vmem:[%s4 + $0x10] sm:$0xff]
    %v187 = vld [vmem:[%s4 + $0x18] sm:$0xff]
    %v188 = vld [vmem:[%s5] sm:$0xff]
    %v189 = vld [vmem:[%s5 + $0x8] sm:$0xff]
    %v190 = vld [vmem:[%s5 + $0x10] sm:$0xff]
    %v191 = vld [vmem:[%s5 + $0x18] sm:$0xff]
    %v192 = vld [vmem:[%s6] sm:$0x1]
    %v194 = vlaneseq
    %v195 = vshrl.u32 %v194, 7
    %v196 = vsub.s32 0, %v195
    %v197 = vrot.slane %v192, %v196
    %vm199 = vcmask 261120
    %v201 = vsel %vm199, 0.0, 0
    %203 = vmatprep.subr.mxu0 0.0
    %204 = vmatpush1.msra.mxu0 0.0
    %205 = vmatprep.subr.mxu0 0.0
    %206 = vmatpush1.msra.mxu0 0.0
    %207 = vmatprep.subr.mxu0 0.0
    %208 = vmatpush1.msra.mxu0 0.0
    %209 = vmatprep.subr.mxu0 0.0
    %210 = vmatpush1.msra.mxu0 0.0
    %211 = vmatprep.subr.mxu0 0.0
    %212 = vmatpush1.msra.mxu0 0.0
    %213 = vmatprep.subr.mxu0 0.0
    %214 = vmatpush1.msra.mxu0 0.0
    %215 = vmatprep.subr.mxu0 0.0
    %216 = vmatpush1.msra.mxu0 0.0
    %217 = vmatprep.subr.mxu0 0.0
    %218 = vmatpush1.msra.mxu0 0.0
    %219 = vmatprep.subr.mxu0 0.0
    %220 = vmatpush1.msra.mxu0 0.0
    %221 = vmatprep.subr.mxu0 0.0
    %222 = vmatpush1.msra.mxu0 0.0
    %223 = vmatprep.subr.mxu0 0.0
    %224 = vmatpush1.msra.mxu0 0.0
    %225 = vmatprep.subr.mxu0 0.0
    %226 = vmatpush1.msra.mxu0 0.0
    %227 = vmatprep.subr.mxu0 0.0
    %228 = vmatpush1.msra.mxu0 %v183
    %229 = vmatprep.subr.mxu0 0.0
    %230 = vmatpush1.msra.mxu0 %v182
    %231 = vmatprep.subr.mxu0 0.0
    %232 = vmatpush1.msra.mxu0 %v181
    %233 = vmatprep.subr.mxu0 0.0
    %234 = vmatpush1.msra.mxu0 %v180
    %235 = vmatprep.subr.mxu0 0.0
    %236 = vmatpush2.msra.mxu0 0.0
    %237 = vmatprep.subr.mxu0 0.0
    %238 = vmatpush2.msra.mxu0 0.0
    %239 = vmatprep.subr.mxu0 0.0
    %240 = vmatpush2.msra.mxu0 0.0
    %241 = vmatprep.subr.mxu0 0.0
    %242 = vmatpush2.msra.mxu0 0.0
    %243 = vmatprep.subr.mxu0 0.0
    %244 = vmatpush2.msra.mxu0 0.0
    %245 = vmatprep.subr.mxu0 0.0
    %246 = vmatpush2.msra.mxu0 0.0
    %247 = vmatprep.subr.mxu0 0.0
    %248 = vmatpush2.msra.mxu0 0.0
    %249 = vmatprep.subr.mxu0 0.0
    %250 = vmatpush2.msra.mxu0 0.0
    %251 = vmatprep.subr.mxu0 0.0
    %252 = vmatpush2.msra.mxu0 0.0
    %253 = vmatprep.subr.mxu0 0.0
    %254 = vmatpush2.msra.mxu0 0.0
    %255 = vmatprep.subr.mxu0 0.0
    %256 = vmatpush2.msra.mxu0 0.0
    %257 = vmatprep.subr.mxu0 0.0
    %258 = vmatpush2.msra.mxu0 0.0
    %259 = vmatprep.subr.mxu0 0.0
    %260 = vmatpush2.msra.mxu0 0.0
    %261 = vmatprep.subr.mxu0 0.0
    %262 = vmatpush2.msra.mxu0 0.0
    %263 = vmatprep.subr.mxu0 0.0
    %264 = vmatpush2.msra.mxu0 0.0
    %265 = vmatprep.subr.mxu0 0.0
    %266 = vmatpush2.msra.mxu0 0.0
    %267 = vmatprep.mubr.f32.mxu0 0.0
    %268 = vmatmul.mubr.f32.gmra.mxu0 %v201
    %v269 = vpop.f32.mrf.mxu0
    %v270 = vadd.f32 0.0, %v269
    %v271 = vpop.f32.mrf.mxu0
    %272 = vdwg.mxu0
    %v273 = vadd.f32 %v142, %v270
    %v274 = vtanh.pop %v273
    %275 = vmatprep.subr.mxu0 0.0
    %276 = vmatpush1.msra.mxu0 0.0
    %277 = vmatprep.subr.mxu0 0.0
    %278 = vmatpush1.msra.mxu0 0.0
    %279 = vmatprep.subr.mxu0 0.0
    %280 = vmatpush1.msra.mxu0 0.0
    %281 = vmatprep.subr.mxu0 0.0
    %282 = vmatpush1.msra.mxu0 0.0
    %283 = vmatprep.subr.mxu0 0.0
    %284 = vmatpush1.msra.mxu0 0.0
    %285 = vmatprep.subr.mxu0 0.0
    %286 = vmatpush1.msra.mxu0 0.0
    %287 = vmatprep.subr.mxu0 0.0
    %288 = vmatpush1.msra.mxu0 0.0
    %289 = vmatprep.subr.mxu0 0.0
    %290 = vmatpush1.msra.mxu0 0.0
    %291 = vmatprep.subr.mxu0 0.0
    %292 = vmatpush1.msra.mxu0 0.0
    %293 = vmatprep.subr.mxu0 0.0
    %294 = vmatpush1.msra.mxu0 0.0
    %295 = vmatprep.subr.mxu0 0.0
    %296 = vmatpush1.msra.mxu0 0.0
    %297 = vmatprep.subr.mxu0 0.0
    %298 = vmatpush1.msra.mxu0 0.0
    %299 = vmatprep.subr.mxu0 0.0
    %300 = vmatpush1.msra.mxu0 %v191
    %301 = vmatprep.subr.mxu0 0.0
    %302 = vmatpush1.msra.mxu0 %v190
    %303 = vmatprep.subr.mxu0 0.0
    %304 = vmatpush1.msra.mxu0 %v189
    %305 = vmatprep.subr.mxu0 0.0
    %306 = vmatpush1.msra.mxu0 %v188
    %307 = vmatprep.subr.mxu0 0.0
    %308 = vmatpush2.msra.mxu0 0.0
    %309 = vmatprep.subr.mxu0 0.0
    %310 = vmatpush2.msra.mxu0 0.0
    %311 = vmatprep.subr.mxu0 0.0
    %312 = vmatpush2.msra.mxu0 0.0
    %313 = vmatprep.subr.mxu0 0.0
    %314 = vmatpush2.msra.mxu0 0.0
    %315 = vmatprep.subr.mxu0 0.0
    %316 = vmatpush2.msra.mxu0 0.0
    %317 = vmatprep.subr.mxu0 0.0
    %318 = vmatpush2.msra.mxu0 0.0
    %319 = vmatprep.subr.mxu0 0.0
    %320 = vmatpush2.msra.mxu0 0.0
    %321 = vmatprep.subr.mxu0 0.0
    %322 = vmatpush2.msra.mxu0 0.0
    %323 = vmatprep.subr.mxu0 0.0
    %324 = vmatpush2.msra.mxu0 0.0
    %325 = vmatprep.subr.mxu0 0.0
    %326 = vmatpush2.msra.mxu0 0.0
    %327 = vmatprep.subr.mxu0 0.0
    %328 = vmatpush2.msra.mxu0 0.0
    %329 = vmatprep.subr.mxu0 0.0
    %330 = vmatpush2.msra.mxu0 0.0
    %331 = vmatprep.subr.mxu0 0.0
    %332 = vmatpush2.msra.mxu0 0.0
    %333 = vmatprep.subr.mxu0 0.0
    %334 = vmatpush2.msra.mxu0 0.0
    %335 = vmatprep.subr.mxu0 0.0
    %336 = vmatpush2.msra.mxu0 0.0
    %337 = vmatprep.subr.mxu0 0.0
    %338 = vmatpush2.msra.mxu0 0.0
    %339 = vmatprep.mubr.f32.mxu0 0.0
    %340 = vmatmul.mubr.f32.gmra.mxu0 %v201
    %v341 = vpop.f32.mrf.mxu0
    %v342 = vadd.f32 0.0, %v341
    %v343 = vpop.f32.mrf.mxu0
    %344 = vdwg.mxu0
    %v346 = vsel %vm199, %v274, 0
    %348 = vmatprep.subr.mxu0 0.0
    %349 = vmatpush1.msra.mxu0 0.0
    %350 = vmatprep.subr.mxu0 0.0
    %351 = vmatpush1.msra.mxu0 0.0
    %352 = vmatprep.subr.mxu0 0.0
    %353 = vmatpush1.msra.mxu0 0.0
    %354 = vmatprep.subr.mxu0 0.0
    %355 = vmatpush1.msra.mxu0 0.0
    %356 = vmatprep.subr.mxu0 0.0
    %357 = vmatpush1.msra.mxu0 0.0
    %358 = vmatprep.subr.mxu0 0.0
    %359 = vmatpush1.msra.mxu0 0.0
    %360 = vmatprep.subr.mxu0 0.0
    %361 = vmatpush1.msra.mxu0 0.0
    %362 = vmatprep.subr.mxu0 0.0
    %363 = vmatpush1.msra.mxu0 0.0
    %364 = vmatprep.subr.mxu0 0.0
    %365 = vmatpush1.msra.mxu0 0.0
    %366 = vmatprep.subr.mxu0 0.0
    %367 = vmatpush1.msra.mxu0 0.0
    %368 = vmatprep.subr.mxu0 0.0
    %369 = vmatpush1.msra.mxu0 0.0
    %370 = vmatprep.subr.mxu0 0.0
    %371 = vmatpush1.msra.mxu0 0.0
    %372 = vmatprep.subr.mxu0 0.0
    %373 = vmatpush1.msra.mxu0 %v187
    %374 = vmatprep.subr.mxu0 0.0
    %375 = vmatpush1.msra.mxu0 %v186
    %376 = vmatprep.subr.mxu0 0.0
    %377 = vmatpush1.msra.mxu0 %v185
    %378 = vmatprep.subr.mxu0 0.0
    %379 = vmatpush1.msra.mxu0 %v184
    %380 = vmatprep.subr.mxu0 0.0
    %381 = vmatpush2.msra.mxu0 0.0
    %382 = vmatprep.subr.mxu0 0.0
    %383 = vmatpush2.msra.mxu0 0.0
    %384 = vmatprep.subr.mxu0 0.0
    %385 = vmatpush2.msra.mxu0 0.0
    %386 = vmatprep.subr.mxu0 0.0
    %387 = vmatpush2.msra.mxu0 0.0
    %388 = vmatprep.subr.mxu0 0.0
    %389 = vmatpush2.msra.mxu0 0.0
    %390 = vmatprep.subr.mxu0 0.0
    %391 = vmatpush2.msra.mxu0 0.0
    %392 = vmatprep.subr.mxu0 0.0
    %393 = vmatpush2.msra.mxu0 0.0
    %394 = vmatprep.subr.mxu0 0.0
    %395 = vmatpush2.msra.mxu0 0.0
    %396 = vmatprep.subr.mxu0 0.0
    %397 = vmatpush2.msra.mxu0 0.0
    %398 = vmatprep.subr.mxu0 0.0
    %399 = vmatpush2.msra.mxu0 0.0
    %400 = vmatprep.subr.mxu0 0.0
    %401 = vmatpush2.msra.mxu0 0.0
    %402 = vmatprep.subr.mxu0 0.0
    %403 = vmatpush2.msra.mxu0 0.0
    %404 = vmatprep.subr.mxu0 0.0
    %405 = vmatpush2.msra.mxu0 0.0
    %406 = vmatprep.subr.mxu0 0.0
    %407 = vmatpush2.msra.mxu0 0.0
    %408 = vmatprep.subr.mxu0 0.0
    %409 = vmatpush2.msra.mxu0 0.0
    %410 = vmatprep.subr.mxu0 0.0
    %411 = vmatpush2.msra.mxu0 0.0
    %412 = vmatprep.mubr.f32.mxu0 0.0
    %413 = vmatmul.mubr.f32.gmra.mxu0 %v346
    %v414 = vpop.f32.mrf.mxu0
    %v415 = vadd.f32 %v342, %v414
    %v416 = vpop.f32.mrf.mxu0
    %417 = vdwg.mxu0
    %v418 = vadd.f32 %v415, %v197
    %v419 = vtanh.pop %v418
    %420 = vmatprep.subr.mxu0 0.0
    %421 = vmatpush1.msra.mxu0 0.0
    %422 = vmatprep.subr.mxu0 0.0
    %423 = vmatpush1.msra.mxu0 0.0
    %424 = vmatprep.subr.mxu0 0.0
    %425 = vmatpush1.msra.mxu0 0.0
    %426 = vmatprep.subr.mxu0 0.0
    %427 = vmatpush1.msra.mxu0 0.0
    %428 = vmatprep.subr.mxu0 0.0
    %429 = vmatpush1.msra.mxu0 0.0
    %430 = vmatprep.subr.mxu0 0.0
    %431 = vmatpush1.msra.mxu0 0.0
    %432 = vmatprep.subr.mxu0 0.0
    %433 = vmatpush1.msra.mxu0 0.0
    %434 = vmatprep.subr.mxu0 0.0
    %435 = vmatpush1.msra.mxu0 0.0
    %436 = vmatprep.subr.mxu0 0.0
    %437 = vmatpush1.msra.mxu0 0.0
    %438 = vmatprep.subr.mxu0 0.0
    %439 = vmatpush1.msra.mxu0 0.0
    %440 = vmatprep.subr.mxu0 0.0
    %441 = vmatpush1.msra.mxu0 0.0
    %442 = vmatprep.subr.mxu0 0.0
    %443 = vmatpush1.msra.mxu0 0.0
    %444 = vmatprep.subr.mxu0 0.0
    %445 = vmatpush1.msra.mxu0 %v183
    %446 = vmatprep.subr.mxu0 0.0
    %447 = vmatpush1.msra.mxu0 %v182
    %448 = vmatprep.subr.mxu0 0.0
    %449 = vmatpush1.msra.mxu0 %v181
    %450 = vmatprep.subr.mxu0 0.0
    %451 = vmatpush1.msra.mxu0 %v180
    %452 = vmatprep.subr.mxu0 0.0
    %453 = vmatpush2.msra.mxu0 0.0
    %454 = vmatprep.subr.mxu0 0.0
    %455 = vmatpush2.msra.mxu0 0.0
    %456 = vmatprep.subr.mxu0 0.0
    %457 = vmatpush2.msra.mxu0 0.0
    %458 = vmatprep.subr.mxu0 0.0
    %459 = vmatpush2.msra.mxu0 0.0
    %460 = vmatprep.subr.mxu0 0.0
    %461 = vmatpush2.msra.mxu0 0.0
    %462 = vmatprep.subr.mxu0 0.0
    %463 = vmatpush2.msra.mxu0 0.0
    %464 = vmatprep.subr.mxu0 0.0
    %465 = vmatpush2.msra.mxu0 0.0
    %466 = vmatprep.subr.mxu0 0.0
    %467 = vmatpush2.msra.mxu0 0.0
    %468 = vmatprep.subr.mxu0 0.0
    %469 = vmatpush2.msra.mxu0 0.0
    %470 = vmatprep.subr.mxu0 0.0
    %471 = vmatpush2.msra.mxu0 0.0
    %472 = vmatprep.subr.mxu0 0.0
    %473 = vmatpush2.msra.mxu0 0.0
    %474 = vmatprep.subr.mxu0 0.0
    %475 = vmatpush2.msra.mxu0 0.0
    %476 = vmatprep.subr.mxu0 0.0
    %477 = vmatpush2.msra.mxu0 0.0
    %478 = vmatprep.subr.mxu0 0.0
    %479 = vmatpush2.msra.mxu0 0.0
    %480 = vmatprep.subr.mxu0 0.0
    %481 = vmatpush2.msra.mxu0 0.0
    %482 = vmatprep.subr.mxu0 0.0
    %483 = vmatpush2.msra.mxu0 0.0
    %484 = vmatprep.mubr.f32.mxu0 0.0
    %485 = vmatmul.mubr.f32.gmra.mxu0 %v346
    %v486 = vpop.f32.mrf.mxu0
    %v487 = vadd.f32 0.0, %v486
    %v488 = vpop.f32.mrf.mxu0
    %489 = vdwg.mxu0
    %v490 = vadd.f32 %v147, %v487
    %v491 = vtanh.pop %v490
    %v493 = vsel %vm199, %v419, 0
    %495 = vmatprep.subr.mxu0 0.0
    %496 = vmatpush1.msra.mxu0 0.0
    %497 = vmatprep.subr.mxu0 0.0
    %498 = vmatpush1.msra.mxu0 0.0
    %499 = vmatprep.subr.mxu0 0.0
    %500 = vmatpush1.msra.mxu0 0.0
    %501 = vmatprep.subr.mxu0 0.0
    %502 = vmatpush1.msra.mxu0 0.0
    %503 = vmatprep.subr.mxu0 0.0
    %504 = vmatpush1.msra.mxu0 0.0
    %505 = vmatprep.subr.mxu0 0.0
    %506 = vmatpush1.msra.mxu0 0.0
    %507 = vmatprep.subr.mxu0 0.0
    %508 = vmatpush1.msra.mxu0 0.0
    %509 = vmatprep.subr.mxu0 0.0
    %510 = vmatpush1.msra.mxu0 0.0
    %511 = vmatprep.subr.mxu0 0.0
    %512 = vmatpush1.msra.mxu0 0.0
    %513 = vmatprep.subr.mxu0 0.0
    %514 = vmatpush1.msra.mxu0 0.0
    %515 = vmatprep.subr.mxu0 0.0
    %516 = vmatpush1.msra.mxu0 0.0
    %517 = vmatprep.subr.mxu0 0.0
    %518 = vmatpush1.msra.mxu0 0.0
    %519 = vmatprep.subr.mxu0 0.0
    %520 = vmatpush1.msra.mxu0 %v191
    %521 = vmatprep.subr.mxu0 0.0
    %522 = vmatpush1.msra.mxu0 %v190
    %523 = vmatprep.subr.mxu0 0.0
    %524 = vmatpush1.msra.mxu0 %v189
    %525 = vmatprep.subr.mxu0 0.0
    %526 = vmatpush1.msra.mxu0 %v188
    %527 = vmatprep.subr.mxu0 0.0
    %528 = vmatpush2.msra.mxu0 0.0
    %529 = vmatprep.subr.mxu0 0.0
    %530 = vmatpush2.msra.mxu0 0.0
    %531 = vmatprep.subr.mxu0 0.0
    %532 = vmatpush2.msra.mxu0 0.0
    %533 = vmatprep.subr.mxu0 0.0
    %534 = vmatpush2.msra.mxu0 0.0
    %535 = vmatprep.subr.mxu0 0.0
    %536 = vmatpush2.msra.mxu0 0.0
    %537 = vmatprep.subr.mxu0 0.0
    %538 = vmatpush2.msra.mxu0 0.0
    %539 = vmatprep.subr.mxu0 0.0
    %540 = vmatpush2.msra.mxu0 0.0
    %541 = vmatprep.subr.mxu0 0.0
    %542 = vmatpush2.msra.mxu0 0.0
    %543 = vmatprep.subr.mxu0 0.0
    %544 = vmatpush2.msra.mxu0 0.0
    %545 = vmatprep.subr.mxu0 0.0
    %546 = vmatpush2.msra.mxu0 0.0
    %547 = vmatprep.subr.mxu0 0.0
    %548 = vmatpush2.msra.mxu0 0.0
    %549 = vmatprep.subr.mxu0 0.0
    %550 = vmatpush2.msra.mxu0 0.0
    %551 = vmatprep.subr.mxu0 0.0
    %552 = vmatpush2.msra.mxu0 0.0
    %553 = vmatprep.subr.mxu0 0.0
    %554 = vmatpush2.msra.mxu0 0.0
    %555 = vmatprep.subr.mxu0 0.0
    %556 = vmatpush2.msra.mxu0 0.0
    %557 = vmatprep.subr.mxu0 0.0
    %558 = vmatpush2.msra.mxu0 0.0
    %559 = vmatprep.mubr.f32.mxu0 0.0
    %560 = vmatmul.mubr.f32.gmra.mxu0 %v493
    %v561 = vpop.f32.mrf.mxu0
    %v562 = vadd.f32 0.0, %v561
    %v563 = vpop.f32.mrf.mxu0
    %564 = vdwg.mxu0
    %v566 = vsel %vm199, %v491, 0
    %568 = vmatprep.subr.mxu0 0.0
    %569 = vmatpush1.msra.mxu0 0.0
    %570 = vmatprep.subr.mxu0 0.0
    %571 = vmatpush1.msra.mxu0 0.0
    %572 = vmatprep.subr.mxu0 0.0
    %573 = vmatpush1.msra.mxu0 0.0
    %574 = vmatprep.subr.mxu0 0.0
    %575 = vmatpush1.msra.mxu0 0.0
    %576 = vmatprep.subr.mxu0 0.0
    %577 = vmatpush1.msra.mxu0 0.0
    %578 = vmatprep.subr.mxu0 0.0
    %579 = vmatpush1.msra.mxu0 0.0
    %580 = vmatprep.subr.mxu0 0.0
    %581 = vmatpush1.msra.mxu0 0.0
    %582 = vmatprep.subr.mxu0 0.0
    %583 = vmatpush1.msra.mxu0 0.0
    %584 = vmatprep.subr.mxu0 0.0
    %585 = vmatpush1.msra.mxu0 0.0
    %586 = vmatprep.subr.mxu0 0.0
    %587 = vmatpush1.msra.mxu0 0.0
    %588 = vmatprep.subr.mxu0 0.0
    %589 = vmatpush1.msra.mxu0 0.0
    %590 = vmatprep.subr.mxu0 0.0
    %591 = vmatpush1.msra.mxu0 0.0
    %592 = vmatprep.subr.mxu0 0.0
    %593 = vmatpush1.msra.mxu0 %v187
    %594 = vmatprep.subr.mxu0 0.0
    %595 = vmatpush1.msra.mxu0 %v186
    %596 = vmatprep.subr.mxu0 0.0
    %597 = vmatpush1.msra.mxu0 %v185
    %598 = vmatprep.subr.mxu0 0.0
    %599 = vmatpush1.msra.mxu0 %v184
    %600 = vmatprep.subr.mxu0 0.0
    %601 = vmatpush2.msra.mxu0 0.0
    %602 = vmatprep.subr.mxu0 0.0
    %603 = vmatpush2.msra.mxu0 0.0
    %604 = vmatprep.subr.mxu0 0.0
    %605 = vmatpush2.msra.mxu0 0.0
    %606 = vmatprep.subr.mxu0 0.0
    %607 = vmatpush2.msra.mxu0 0.0
    %608 = vmatprep.subr.mxu0 0.0
    %609 = vmatpush2.msra.mxu0 0.0
    %610 = vmatprep.subr.mxu0 0.0
    %611 = vmatpush2.msra.mxu0 0.0
    %612 = vmatprep.subr.mxu0 0.0
    %613 = vmatpush2.msra.mxu0 0.0
    %614 = vmatprep.subr.mxu0 0.0
    %615 = vmatpush2.msra.mxu0 0.0
    %616 = vmatprep.subr.mxu0 0.0
    %617 = vmatpush2.msra.mxu0 0.0
    %618 = vmatprep.subr.mxu0 0.0
    %619 = vmatpush2.msra.mxu0 0.0
    %620 = vmatprep.subr.mxu0 0.0
    %621 = vmatpush2.msra.mxu0 0.0
    %622 = vmatprep.subr.mxu0 0.0
    %623 = vmatpush2.msra.mxu0 0.0
    %624 = vmatprep.subr.mxu0 0.0
    %625 = vmatpush2.msra.mxu0 0.0
    %626 = vmatprep.subr.mxu0 0.0
    %627 = vmatpush2.msra.mxu0 0.0
    %628 = vmatprep.subr.mxu0 0.0
    %629 = vmatpush2.msra.mxu0 0.0
    %630 = vmatprep.subr.mxu0 0.0
    %631 = vmatpush2.msra.mxu0 0.0
    %632 = vmatprep.mubr.f32.mxu0 0.0
    %633 = vmatmul.mubr.f32.gmra.mxu0 %v566
    %v634 = vpop.f32.mrf.mxu0
    %v635 = vadd.f32 %v562, %v634
    %v636 = vpop.f32.mrf.mxu0
    %637 = vdwg.mxu0
    %v638 = vadd.f32 %v635, %v197
    %v639 = vtanh.pop %v638
    %640 = vmatprep.subr.mxu0 0.0
    %641 = vmatpush1.msra.mxu0 0.0
    %642 = vmatprep.subr.mxu0 0.0
    %643 = vmatpush1.msra.mxu0 0.0
    %644 = vmatprep.subr.mxu0 0.0
    %645 = vmatpush1.msra.mxu0 0.0
    %646 = vmatprep.subr.mxu0 0.0
    %647 = vmatpush1.msra.mxu0 0.0
    %648 = vmatprep.subr.mxu0 0.0
    %649 = vmatpush1.msra.mxu0 0.0
    %650 = vmatprep.subr.mxu0 0.0
    %651 = vmatpush1.msra.mxu0 0.0
    %652 = vmatprep.subr.mxu0 0.0
    %653 = vmatpush1.msra.mxu0 0.0
    %654 = vmatprep.subr.mxu0 0.0
    %655 = vmatpush1.msra.mxu0 0.0
    %656 = vmatprep.subr.mxu0 0.0
    %657 = vmatpush1.msra.mxu0 0.0
    %658 = vmatprep.subr.mxu0 0.0
    %659 = vmatpush1.msra.mxu0 0.0
    %660 = vmatprep.subr.mxu0 0.0
    %661 = vmatpush1.msra.mxu0 0.0
    %662 = vmatprep.subr.mxu0 0.0
    %663 = vmatpush1.msra.mxu0 0.0
    %664 = vmatprep.subr.mxu0 0.0
    %665 = vmatpush1.msra.mxu0 %v183
    %666 = vmatprep.subr.mxu0 0.0
    %667 = vmatpush1.msra.mxu0 %v182
    %668 = vmatprep.subr.mxu0 0.0
    %669 = vmatpush1.msra.mxu0 %v181
    %670 = vmatprep.subr.mxu0 0.0
    %671 = vmatpush1.msra.mxu0 %v180
    %672 = vmatprep.subr.mxu0 0.0
    %673 = vmatpush2.msra.mxu0 0.0
    %674 = vmatprep.subr.mxu0 0.0
    %675 = vmatpush2.msra.mxu0 0.0
    %676 = vmatprep.subr.mxu0 0.0
    %677 = vmatpush2.msra.mxu0 0.0
    %678 = vmatprep.subr.mxu0 0.0
    %679 = vmatpush2.msra.mxu0 0.0
    %680 = vmatprep.subr.mxu0 0.0
    %681 = vmatpush2.msra.mxu0 0.0
    %682 = vmatprep.subr.mxu0 0.0
    %683 = vmatpush2.msra.mxu0 0.0
    %684 = vmatprep.subr.mxu0 0.0
    %685 = vmatpush2.msra.mxu0 0.0
    %686 = vmatprep.subr.mxu0 0.0
    %687 = vmatpush2.msra.mxu0 0.0
    %688 = vmatprep.subr.mxu0 0.0
    %689 = vmatpush2.msra.mxu0 0.0
    %690 = vmatprep.subr.mxu0 0.0
    %691 = vmatpush2.msra.mxu0 0.0
    %692 = vmatprep.subr.mxu0 0.0
    %693 = vmatpush2.msra.mxu0 0.0
    %694 = vmatprep.subr.mxu0 0.0
    %695 = vmatpush2.msra.mxu0 0.0
    %696 = vmatprep.subr.mxu0 0.0
    %697 = vmatpush2.msra.mxu0 0.0
    %698 = vmatprep.subr.mxu0 0.0
    %699 = vmatpush2.msra.mxu0 0.0
    %700 = vmatprep.subr.mxu0 0.0
    %701 = vmatpush2.msra.mxu0 0.0
    %702 = vmatprep.subr.mxu0 0.0
    %703 = vmatpush2.msra.mxu0 0.0
    %704 = vmatprep.mubr.f32.mxu0 0.0
    %705 = vmatmul.mubr.f32.gmra.mxu0 %v566
    %v706 = vpop.f32.mrf.mxu0
    %v707 = vadd.f32 0.0, %v706
    %v708 = vpop.f32.mrf.mxu0
    %709 = vdwg.mxu0
    %v710 = vadd.f32 %v152, %v707
    %v711 = vtanh.pop %v710
    %v713 = vsel %vm199, %v639, 0
    %715 = vmatprep.subr.mxu0 0.0
    %716 = vmatpush1.msra.mxu0 0.0
    %717 = vmatprep.subr.mxu0 0.0
    %718 = vmatpush1.msra.mxu0 0.0
    %719 = vmatprep.subr.mxu0 0.0
    %720 = vmatpush1.msra.mxu0 0.0
    %721 = vmatprep.subr.mxu0 0.0
    %722 = vmatpush1.msra.mxu0 0.0
    %723 = vmatprep.subr.mxu0 0.0
    %724 = vmatpush1.msra.mxu0 0.0
    %725 = vmatprep.subr.mxu0 0.0
    %726 = vmatpush1.msra.mxu0 0.0
    %727 = vmatprep.subr.mxu0 0.0
    %728 = vmatpush1.msra.mxu0 0.0
    %729 = vmatprep.subr.mxu0 0.0
    %730 = vmatpush1.msra.mxu0 0.0
    %731 = vmatprep.subr.mxu0 0.0
    %732 = vmatpush1.msra.mxu0 0.0
    %733 = vmatprep.subr.mxu0 0.0
    %734 = vmatpush1.msra.mxu0 0.0
    %735 = vmatprep.subr.mxu0 0.0
    %736 = vmatpush1.msra.mxu0 0.0
    %737 = vmatprep.subr.mxu0 0.0
    %738 = vmatpush1.msra.mxu0 0.0
    %739 = vmatprep.subr.mxu0 0.0
    %740 = vmatpush1.msra.mxu0 %v191
    %741 = vmatprep.subr.mxu0 0.0
    %742 = vmatpush1.msra.mxu0 %v190
    %743 = vmatprep.subr.mxu0 0.0
    %744 = vmatpush1.msra.mxu0 %v189
    %745 = vmatprep.subr.mxu0 0.0
    %746 = vmatpush1.msra.mxu0 %v188
    %747 = vmatprep.subr.mxu0 0.0
    %748 = vmatpush2.msra.mxu0 0.0
    %749 = vmatprep.subr.mxu0 0.0
    %750 = vmatpush2.msra.mxu0 0.0
    %751 = vmatprep.subr.mxu0 0.0
    %752 = vmatpush2.msra.mxu0 0.0
    %753 = vmatprep.subr.mxu0 0.0
    %754 = vmatpush2.msra.mxu0 0.0
    %755 = vmatprep.subr.mxu0 0.0
    %756 = vmatpush2.msra.mxu0 0.0
    %757 = vmatprep.subr.mxu0 0.0
    %758 = vmatpush2.msra.mxu0 0.0
    %759 = vmatprep.subr.mxu0 0.0
    %760 = vmatpush2.msra.mxu0 0.0
    %761 = vmatprep.subr.mxu0 0.0
    %762 = vmatpush2.msra.mxu0 0.0
    %763 = vmatprep.subr.mxu0 0.0
    %764 = vmatpush2.msra.mxu0 0.0
    %765 = vmatprep.subr.mxu0 0.0
    %766 = vmatpush2.msra.mxu0 0.0
    %767 = vmatprep.subr.mxu0 0.0
    %768 = vmatpush2.msra.mxu0 0.0
    %769 = vmatprep.subr.mxu0 0.0
    %770 = vmatpush2.msra.mxu0 0.0
    %771 = vmatprep.subr.mxu0 0.0
    %772 = vmatpush2.msra.mxu0 0.0
    %773 = vmatprep.subr.mxu0 0.0
    %774 = vmatpush2.msra.mxu0 0.0
    %775 = vmatprep.subr.mxu0 0.0
    %776 = vmatpush2.msra.mxu0 0.0
    %777 = vmatprep.subr.mxu0 0.0
    %778 = vmatpush2.msra.mxu0 0.0
    %779 = vmatprep.mubr.f32.mxu0 0.0
    %780 = vmatmul.mubr.f32.gmra.mxu0 %v713
    %v781 = vpop.f32.mrf.mxu0
    %v782 = vadd.f32 0.0, %v781
    %v783 = vpop.f32.mrf.mxu0
    %784 = vdwg.mxu0
    %v786 = vsel %vm199, %v711, 0
    %788 = vmatprep.subr.mxu0 0.0
    %789 = vmatpush1.msra.mxu0 0.0
    %790 = vmatprep.subr.mxu0 0.0
    %791 = vmatpush1.msra.mxu0 0.0
    %792 = vmatprep.subr.mxu0 0.0
    %793 = vmatpush1.msra.mxu0 0.0
    %794 = vmatprep.subr.mxu0 0.0
    %795 = vmatpush1.msra.mxu0 0.0
    %796 = vmatprep.subr.mxu0 0.0
    %797 = vmatpush1.msra.mxu0 0.0
    %798 = vmatprep.subr.mxu0 0.0
    %799 = vmatpush1.msra.mxu0 0.0
    %800 = vmatprep.subr.mxu0 0.0
    %801 = vmatpush1.msra.mxu0 0.0
    %802 = vmatprep.subr.mxu0 0.0
    %803 = vmatpush1.msra.mxu0 0.0
    %804 = vmatprep.subr.mxu0 0.0
    %805 = vmatpush1.msra.mxu0 0.0
    %806 = vmatprep.subr.mxu0 0.0
    %807 = vmatpush1.msra.mxu0 0.0
    %808 = vmatprep.subr.mxu0 0.0
    %809 = vmatpush1.msra.mxu0 0.0
    %810 = vmatprep.subr.mxu0 0.0
    %811 = vmatpush1.msra.mxu0 0.0
    %812 = vmatprep.subr.mxu0 0.0
    %813 = vmatpush1.msra.mxu0 %v187
    %814 = vmatprep.subr.mxu0 0.0
    %815 = vmatpush1.msra.mxu0 %v186
    %816 = vmatprep.subr.mxu0 0.0
    %817 = vmatpush1.msra.mxu0 %v185
    %818 = vmatprep.subr.mxu0 0.0
    %819 = vmatpush1.msra.mxu0 %v184
    %820 = vmatprep.subr.mxu0 0.0
    %821 = vmatpush2.msra.mxu0 0.0
    %822 = vmatprep.subr.mxu0 0.0
    %823 = vmatpush2.msra.mxu0 0.0
    %824 = vmatprep.subr.mxu0 0.0
    %825 = vmatpush2.msra.mxu0 0.0
    %826 = vmatprep.subr.mxu0 0.0
    %827 = vmatpush2.msra.mxu0 0.0
    %828 = vmatprep.subr.mxu0 0.0
    %829 = vmatpush2.msra.mxu0 0.0
    %830 = vmatprep.subr.mxu0 0.0
    %831 = vmatpush2.msra.mxu0 0.0
    %832 = vmatprep.subr.mxu0 0.0
    %833 = vmatpush2.msra.mxu0 0.0
    %834 = vmatprep.subr.mxu0 0.0
    %835 = vmatpush2.msra.mxu0 0.0
    %836 = vmatprep.subr.mxu0 0.0
    %837 = vmatpush2.msra.mxu0 0.0
    %838 = vmatprep.subr.mxu0 0.0
    %839 = vmatpush2.msra.mxu0 0.0
    %840 = vmatprep.subr.mxu0 0.0
    %841 = vmatpush2.msra.mxu0 0.0
    %842 = vmatprep.subr.mxu0 0.0
    %843 = vmatpush2.msra.mxu0 0.0
    %844 = vmatprep.subr.mxu0 0.0
    %845 = vmatpush2.msra.mxu0 0.0
    %846 = vmatprep.subr.mxu0 0.0
    %847 = vmatpush2.msra.mxu0 0.0
    %848 = vmatprep.subr.mxu0 0.0
    %849 = vmatpush2.msra.mxu0 0.0
    %850 = vmatprep.subr.mxu0 0.0
    %851 = vmatpush2.msra.mxu0 0.0
    %852 = vmatprep.mubr.f32.mxu0 0.0
    %853 = vmatmul.mubr.f32.gmra.mxu0 %v786
    %v854 = vpop.f32.mrf.mxu0
    %v855 = vadd.f32 %v782, %v854
    %v856 = vpop.f32.mrf.mxu0
    %857 = vdwg.mxu0
    %v858 = vadd.f32 %v855, %v197
    %v859 = vtanh.pop %v858
    %860 = vmatprep.subr.mxu0 0.0
    %861 = vmatpush1.msra.mxu0 0.0
    %862 = vmatprep.subr.mxu0 0.0
    %863 = vmatpush1.msra.mxu0 0.0
    %864 = vmatprep.subr.mxu0 0.0
    %865 = vmatpush1.msra.mxu0 0.0
    %866 = vmatprep.subr.mxu0 0.0
    %867 = vmatpush1.msra.mxu0 0.0
    %868 = vmatprep.subr.mxu0 0.0
    %869 = vmatpush1.msra.mxu0 0.0
    %870 = vmatprep.subr.mxu0 0.0
    %871 = vmatpush1.msra.mxu0 0.0
    %872 = vmatprep.subr.mxu0 0.0
    %873 = vmatpush1.msra.mxu0 0.0
    %874 = vmatprep.subr.mxu0 0.0
    %875 = vmatpush1.msra.mxu0 0.0
    %876 = vmatprep.subr.mxu0 0.0
    %877 = vmatpush1.msra.mxu0 0.0
    %878 = vmatprep.subr.mxu0 0.0
    %879 = vmatpush1.msra.mxu0 0.0
    %880 = vmatprep.subr.mxu0 0.0
    %881 = vmatpush1.msra.mxu0 0.0
    %882 = vmatprep.subr.mxu0 0.0
    %883 = vmatpush1.msra.mxu0 0.0
    %884 = vmatprep.subr.mxu0 0.0
    %885 = vmatpush1.msra.mxu0 %v183
    %886 = vmatprep.subr.mxu0 0.0
    %887 = vmatpush1.msra.mxu0 %v182
    %888 = vmatprep.subr.mxu0 0.0
    %889 = vmatpush1.msra.mxu0 %v181
    %890 = vmatprep.subr.mxu0 0.0
    %891 = vmatpush1.msra.mxu0 %v180
    %892 = vmatprep.subr.mxu0 0.0
    %893 = vmatpush2.msra.mxu0 0.0
    %894 = vmatprep.subr.mxu0 0.0
    %895 = vmatpush2.msra.mxu0 0.0
    %896 = vmatprep.subr.mxu0 0.0
    %897 = vmatpush2.msra.mxu0 0.0
    %898 = vmatprep.subr.mxu0 0.0
    %899 = vmatpush2.msra.mxu0 0.0
    %900 = vmatprep.subr.mxu0 0.0
    %901 = vmatpush2.msra.mxu0 0.0
    %902 = vmatprep.subr.mxu0 0.0
    %903 = vmatpush2.msra.mxu0 0.0
    %904 = vmatprep.subr.mxu0 0.0
    %905 = vmatpush2.msra.mxu0 0.0
    %906 = vmatprep.subr.mxu0 0.0
    %907 = vmatpush2.msra.mxu0 0.0
    %908 = vmatprep.subr.mxu0 0.0
    %909 = vmatpush2.msra.mxu0 0.0
    %910 = vmatprep.subr.mxu0 0.0
    %911 = vmatpush2.msra.mxu0 0.0
    %912 = vmatprep.subr.mxu0 0.0
    %913 = vmatpush2.msra.mxu0 0.0
    %914 = vmatprep.subr.mxu0 0.0
    %915 = vmatpush2.msra.mxu0 0.0
    %916 = vmatprep.subr.mxu0 0.0
    %917 = vmatpush2.msra.mxu0 0.0
    %918 = vmatprep.subr.mxu0 0.0
    %919 = vmatpush2.msra.mxu0 0.0
    %920 = vmatprep.subr.mxu0 0.0
    %921 = vmatpush2.msra.mxu0 0.0
    %922 = vmatprep.subr.mxu0 0.0
    %923 = vmatpush2.msra.mxu0 0.0
    %924 = vmatprep.mubr.f32.mxu0 0.0
    %925 = vmatmul.mubr.f32.gmra.mxu0 %v786
    %v926 = vpop.f32.mrf.mxu0
    %v927 = vadd.f32 0.0, %v926
    %v928 = vpop.f32.mrf.mxu0
    %929 = vdwg.mxu0
    %v930 = vadd.f32 %v157, %v927
    %v931 = vtanh.pop %v930
    %v933 = vsel %vm199, %v859, 0
    %935 = vmatprep.subr.mxu0 0.0
    %936 = vmatpush1.msra.mxu0 0.0
    %937 = vmatprep.subr.mxu0 0.0
    %938 = vmatpush1.msra.mxu0 0.0
    %939 = vmatprep.subr.mxu0 0.0
    %940 = vmatpush1.msra.mxu0 0.0
    %941 = vmatprep.subr.mxu0 0.0
    %942 = vmatpush1.msra.mxu0 0.0
    %943 = vmatprep.subr.mxu0 0.0
    %944 = vmatpush1.msra.mxu0 0.0
    %945 = vmatprep.subr.mxu0 0.0
    %946 = vmatpush1.msra.mxu0 0.0
    %947 = vmatprep.subr.mxu0 0.0
    %948 = vmatpush1.msra.mxu0 0.0
    %949 = vmatprep.subr.mxu0 0.0
    %950 = vmatpush1.msra.mxu0 0.0
    %951 = vmatprep.subr.mxu0 0.0
    %952 = vmatpush1.msra.mxu0 0.0
    %953 = vmatprep.subr.mxu0 0.0
    %954 = vmatpush1.msra.mxu0 0.0
    %955 = vmatprep.subr.mxu0 0.0
    %956 = vmatpush1.msra.mxu0 0.0
    %957 = vmatprep.subr.mxu0 0.0
    %958 = vmatpush1.msra.mxu0 0.0
    %959 = vmatprep.subr.mxu0 0.0
    %960 = vmatpush1.msra.mxu0 %v191
    %961 = vmatprep.subr.mxu0 0.0
    %962 = vmatpush1.msra.mxu0 %v190
    %963 = vmatprep.subr.mxu0 0.0
    %964 = vmatpush1.msra.mxu0 %v189
    %965 = vmatprep.subr.mxu0 0.0
    %966 = vmatpush1.msra.mxu0 %v188
    %967 = vmatprep.subr.mxu0 0.0
    %968 = vmatpush2.msra.mxu0 0.0
    %969 = vmatprep.subr.mxu0 0.0
    %970 = vmatpush2.msra.mxu0 0.0
    %971 = vmatprep.subr.mxu0 0.0
    %972 = vmatpush2.msra.mxu0 0.0
    %973 = vmatprep.subr.mxu0 0.0
    %974 = vmatpush2.msra.mxu0 0.0
    %975 = vmatprep.subr.mxu0 0.0
    %976 = vmatpush2.msra.mxu0 0.0
    %977 = vmatprep.subr.mxu0 0.0
    %978 = vmatpush2.msra.mxu0 0.0
    %979 = vmatprep.subr.mxu0 0.0
    %980 = vmatpush2.msra.mxu0 0.0
    %981 = vmatprep.subr.mxu0 0.0
    %982 = vmatpush2.msra.mxu0 0.0
    %983 = vmatprep.subr.mxu0 0.0
    %984 = vmatpush2.msra.mxu0 0.0
    %985 = vmatprep.subr.mxu0 0.0
    %986 = vmatpush2.msra.mxu0 0.0
    %987 = vmatprep.subr.mxu0 0.0
    %988 = vmatpush2.msra.mxu0 0.0
    %989 = vmatprep.subr.mxu0 0.0
    %990 = vmatpush2.msra.mxu0 0.0
    %991 = vmatprep.subr.mxu0 0.0
    %992 = vmatpush2.msra.mxu0 0.0
    %993 = vmatprep.subr.mxu0 0.0
    %994 = vmatpush2.msra.mxu0 0.0
    %995 = vmatprep.subr.mxu0 0.0
    %996 = vmatpush2.msra.mxu0 0.0
    %997 = vmatprep.subr.mxu0 0.0
    %998 = vmatpush2.msra.mxu0 0.0
    %999 = vmatprep.mubr.f32.mxu0 0.0
    %1000 = vmatmul.mubr.f32.gmra.mxu0 %v933
    %v1001 = vpop.f32.mrf.mxu0
    %v1002 = vadd.f32 0.0, %v1001
    %v1003 = vpop.f32.mrf.mxu0
    %1004 = vdwg.mxu0
    %v1006 = vsel %vm199, %v931, 0
    %1008 = vmatprep.subr.mxu0 0.0
    %1009 = vmatpush1.msra.mxu0 0.0
    %1010 = vmatprep.subr.mxu0 0.0
    %1011 = vmatpush1.msra.mxu0 0.0
    %1012 = vmatprep.subr.mxu0 0.0
    %1013 = vmatpush1.msra.mxu0 0.0
    %1014 = vmatprep.subr.mxu0 0.0
    %1015 = vmatpush1.msra.mxu0 0.0
    %1016 = vmatprep.subr.mxu0 0.0
    %1017 = vmatpush1.msra.mxu0 0.0
    %1018 = vmatprep.subr.mxu0 0.0
    %1019 = vmatpush1.msra.mxu0 0.0
    %1020 = vmatprep.subr.mxu0 0.0
    %1021 = vmatpush1.msra.mxu0 0.0
    %1022 = vmatprep.subr.mxu0 0.0
    %1023 = vmatpush1.msra.mxu0 0.0
    %1024 = vmatprep.subr.mxu0 0.0
    %1025 = vmatpush1.msra.mxu0 0.0
    %1026 = vmatprep.subr.mxu0 0.0
    %1027 = vmatpush1.msra.mxu0 0.0
    %1028 = vmatprep.subr.mxu0 0.0
    %1029 = vmatpush1.msra.mxu0 0.0
    %1030 = vmatprep.subr.mxu0 0.0
    %1031 = vmatpush1.msra.mxu0 0.0
    %1032 = vmatprep.subr.mxu0 0.0
    %1033 = vmatpush1.msra.mxu0 %v187
    %1034 = vmatprep.subr.mxu0 0.0
    %1035 = vmatpush1.msra.mxu0 %v186
    %1036 = vmatprep.subr.mxu0 0.0
    %1037 = vmatpush1.msra.mxu0 %v185
    %1038 = vmatprep.subr.mxu0 0.0
    %1039 = vmatpush1.msra.mxu0 %v184
    %1040 = vmatprep.subr.mxu0 0.0
    %1041 = vmatpush2.msra.mxu0 0.0
    %1042 = vmatprep.subr.mxu0 0.0
    %1043 = vmatpush2.msra.mxu0 0.0
    %1044 = vmatprep.subr.mxu0 0.0
    %1045 = vmatpush2.msra.mxu0 0.0
    %1046 = vmatprep.subr.mxu0 0.0
    %1047 = vmatpush2.msra.mxu0 0.0
    %1048 = vmatprep.subr.mxu0 0.0
    %1049 = vmatpush2.msra.mxu0 0.0
    %1050 = vmatprep.subr.mxu0 0.0
    %1051 = vmatpush2.msra.mxu0 0.0
    %1052 = vmatprep.subr.mxu0 0.0
    %1053 = vmatpush2.msra.mxu0 0.0
    %1054 = vmatprep.subr.mxu0 0.0
    %1055 = vmatpush2.msra.mxu0 0.0
    %1056 = vmatprep.subr.mxu0 0.0
    %1057 = vmatpush2.msra.mxu0 0.0
    %1058 = vmatprep.subr.mxu0 0.0
    %1059 = vmatpush2.msra.mxu0 0.0
    %1060 = vmatprep.subr.mxu0 0.0
    %1061 = vmatpush2.msra.mxu0 0.0
    %1062 = vmatprep.subr.mxu0 0.0
    %1063 = vmatpush2.msra.mxu0 0.0
    %1064 = vmatprep.subr.mxu0 0.0
    %1065 = vmatpush2.msra.mxu0 0.0
    %1066 = vmatprep.subr.mxu0 0.0
    %1067 = vmatpush2.msra.mxu0 0.0
    %1068 = vmatprep.subr.mxu0 0.0
    %1069 = vmatpush2.msra.mxu0 0.0
    %1070 = vmatprep.subr.mxu0 0.0
    %1071 = vmatpush2.msra.mxu0 0.0
    %1072 = vmatprep.mubr.f32.mxu0 0.0
    %1073 = vmatmul.mubr.f32.gmra.mxu0 %v1006
    %v1074 = vpop.f32.mrf.mxu0
    %v1075 = vadd.f32 %v1002, %v1074
    %v1076 = vpop.f32.mrf.mxu0
    %1077 = vdwg.mxu0
    %v1078 = vadd.f32 %v1075, %v197
    %v1079 = vtanh.pop %v1078
    %1080 = vmatprep.subr.mxu0 0.0
    %1081 = vmatpush1.msra.mxu0 0.0
    %1082 = vmatprep.subr.mxu0 0.0
    %1083 = vmatpush1.msra.mxu0 0.0
    %1084 = vmatprep.subr.mxu0 0.0
    %1085 = vmatpush1.msra.mxu0 0.0
    %1086 = vmatprep.subr.mxu0 0.0
    %1087 = vmatpush1.msra.mxu0 0.0
    %1088 = vmatprep.subr.mxu0 0.0
    %1089 = vmatpush1.msra.mxu0 0.0
    %1090 = vmatprep.subr.mxu0 0.0
    %1091 = vmatpush1.msra.mxu0 0.0
    %1092 = vmatprep.subr.mxu0 0.0
    %1093 = vmatpush1.msra.mxu0 0.0
    %1094 = vmatprep.subr.mxu0 0.0
    %1095 = vmatpush1.msra.mxu0 0.0
    %1096 = vmatprep.subr.mxu0 0.0
    %1097 = vmatpush1.msra.mxu0 0.0
    %1098 = vmatprep.subr.mxu0 0.0
    %1099 = vmatpush1.msra.mxu0 0.0
    %1100 = vmatprep.subr.mxu0 0.0
    %1101 = vmatpush1.msra.mxu0 0.0
    %1102 = vmatprep.subr.mxu0 0.0
    %1103 = vmatpush1.msra.mxu0 0.0
    %1104 = vmatprep.subr.mxu0 0.0
    %1105 = vmatpush1.msra.mxu0 %v183
    %1106 = vmatprep.subr.mxu0 0.0
    %1107 = vmatpush1.msra.mxu0 %v182
    %1108 = vmatprep.subr.mxu0 0.0
    %1109 = vmatpush1.msra.mxu0 %v181
    %1110 = vmatprep.subr.mxu0 0.0
    %1111 = vmatpush1.msra.mxu0 %v180
    %1112 = vmatprep.subr.mxu0 0.0
    %1113 = vmatpush2.msra.mxu0 0.0
    %1114 = vmatprep.subr.mxu0 0.0
    %1115 = vmatpush2.msra.mxu0 0.0
    %1116 = vmatprep.subr.mxu0 0.0
    %1117 = vmatpush2.msra.mxu0 0.0
    %1118 = vmatprep.subr.mxu0 0.0
    %1119 = vmatpush2.msra.mxu0 0.0
    %1120 = vmatprep.subr.mxu0 0.0
    %1121 = vmatpush2.msra.mxu0 0.0
    %1122 = vmatprep.subr.mxu0 0.0
    %1123 = vmatpush2.msra.mxu0 0.0
    %1124 = vmatprep.subr.mxu0 0.0
    %1125 = vmatpush2.msra.mxu0 0.0
    %1126 = vmatprep.subr.mxu0 0.0
    %1127 = vmatpush2.msra.mxu0 0.0
    %1128 = vmatprep.subr.mxu0 0.0
    %1129 = vmatpush2.msra.mxu0 0.0
    %1130 = vmatprep.subr.mxu0 0.0
    %1131 = vmatpush2.msra.mxu0 0.0
    %1132 = vmatprep.subr.mxu0 0.0
    %1133 = vmatpush2.msra.mxu0 0.0
    %1134 = vmatprep.subr.mxu0 0.0
    %1135 = vmatpush2.msra.mxu0 0.0
    %1136 = vmatprep.subr.mxu0 0.0
    %1137 = vmatpush2.msra.mxu0 0.0
    %1138 = vmatprep.subr.mxu0 0.0
    %1139 = vmatpush2.msra.mxu0 0.0
    %1140 = vmatprep.subr.mxu0 0.0
    %1141 = vmatpush2.msra.mxu0 0.0
    %1142 = vmatprep.subr.mxu0 0.0
    %1143 = vmatpush2.msra.mxu0 0.0
    %1144 = vmatprep.mubr.f32.mxu0 0.0
    %1145 = vmatmul.mubr.f32.gmra.mxu0 %v1006
    %v1146 = vpop.f32.mrf.mxu0
    %v1147 = vadd.f32 0.0, %v1146
    %v1148 = vpop.f32.mrf.mxu0
    %1149 = vdwg.mxu0
    %v1150 = vadd.f32 %v162, %v1147
    %v1151 = vtanh.pop %v1150
    %v1153 = vsel %vm199, %v1079, 0
    %1155 = vmatprep.subr.mxu0 0.0
    %1156 = vmatpush1.msra.mxu0 0.0
    %1157 = vmatprep.subr.mxu0 0.0
    %1158 = vmatpush1.msra.mxu0 0.0
    %1159 = vmatprep.subr.mxu0 0.0
    %1160 = vmatpush1.msra.mxu0 0.0
    %1161 = vmatprep.subr.mxu0 0.0
    %1162 = vmatpush1.msra.mxu0 0.0
    %1163 = vmatprep.subr.mxu0 0.0
    %1164 = vmatpush1.msra.mxu0 0.0
    %1165 = vmatprep.subr.mxu0 0.0
    %1166 = vmatpush1.msra.mxu0 0.0
    %1167 = vmatprep.subr.mxu0 0.0
    %1168 = vmatpush1.msra.mxu0 0.0
    %1169 = vmatprep.subr.mxu0 0.0
    %1170 = vmatpush1.msra.mxu0 0.0
    %1171 = vmatprep.subr.mxu0 0.0
    %1172 = vmatpush1.msra.mxu0 0.0
    %1173 = vmatprep.subr.mxu0 0.0
    %1174 = vmatpush1.msra.mxu0 0.0
    %1175 = vmatprep.subr.mxu0 0.0
    %1176 = vmatpush1.msra.mxu0 0.0
    %1177 = vmatprep.subr.mxu0 0.0
    %1178 = vmatpush1.msra.mxu0 0.0
    %1179 = vmatprep.subr.mxu0 0.0
    %1180 = vmatpush1.msra.mxu0 %v191
    %1181 = vmatprep.subr.mxu0 0.0
    %1182 = vmatpush1.msra.mxu0 %v190
    %1183 = vmatprep.subr.mxu0 0.0
    %1184 = vmatpush1.msra.mxu0 %v189
    %1185 = vmatprep.subr.mxu0 0.0
    %1186 = vmatpush1.msra.mxu0 %v188
    %1187 = vmatprep.subr.mxu0 0.0
    %1188 = vmatpush2.msra.mxu0 0.0
    %1189 = vmatprep.subr.mxu0 0.0
    %1190 = vmatpush2.msra.mxu0 0.0
    %1191 = vmatprep.subr.mxu0 0.0
    %1192 = vmatpush2.msra.mxu0 0.0
    %1193 = vmatprep.subr.mxu0 0.0
    %1194 = vmatpush2.msra.mxu0 0.0
    %1195 = vmatprep.subr.mxu0 0.0
    %1196 = vmatpush2.msra.mxu0 0.0
    %1197 = vmatprep.subr.mxu0 0.0
    %1198 = vmatpush2.msra.mxu0 0.0
    %1199 = vmatprep.subr.mxu0 0.0
    %1200 = vmatpush2.msra.mxu0 0.0
    %1201 = vmatprep.subr.mxu0 0.0
    %1202 = vmatpush2.msra.mxu0 0.0
    %1203 = vmatprep.subr.mxu0 0.0
    %1204 = vmatpush2.msra.mxu0 0.0
    %1205 = vmatprep.subr.mxu0 0.0
    %1206 = vmatpush2.msra.mxu0 0.0
    %1207 = vmatprep.subr.mxu0 0.0
    %1208 = vmatpush2.msra.mxu0 0.0
    %1209 = vmatprep.subr.mxu0 0.0
    %1210 = vmatpush2.msra.mxu0 0.0
    %1211 = vmatprep.subr.mxu0 0.0
    %1212 = vmatpush2.msra.mxu0 0.0
    %1213 = vmatprep.subr.mxu0 0.0
    %1214 = vmatpush2.msra.mxu0 0.0
    %1215 = vmatprep.subr.mxu0 0.0
    %1216 = vmatpush2.msra.mxu0 0.0
    %1217 = vmatprep.subr.mxu0 0.0
    %1218 = vmatpush2.msra.mxu0 0.0
    %1219 = vmatprep.mubr.f32.mxu0 0.0
    %1220 = vmatmul.mubr.f32.gmra.mxu0 %v1153
    %v1221 = vpop.f32.mrf.mxu0
    %v1222 = vadd.f32 0.0, %v1221
    %v1223 = vpop.f32.mrf.mxu0
    %1224 = vdwg.mxu0
    %v1226 = vsel %vm199, %v1151, 0
    %1228 = vmatprep.subr.mxu0 0.0
    %1229 = vmatpush1.msra.mxu0 0.0
    %1230 = vmatprep.subr.mxu0 0.0
    %1231 = vmatpush1.msra.mxu0 0.0
    %1232 = vmatprep.subr.mxu0 0.0
    %1233 = vmatpush1.msra.mxu0 0.0
    %1234 = vmatprep.subr.mxu0 0.0
    %1235 = vmatpush1.msra.mxu0 0.0
    %1236 = vmatprep.subr.mxu0 0.0
    %1237 = vmatpush1.msra.mxu0 0.0
    %1238 = vmatprep.subr.mxu0 0.0
    %1239 = vmatpush1.msra.mxu0 0.0
    %1240 = vmatprep.subr.mxu0 0.0
    %1241 = vmatpush1.msra.mxu0 0.0
    %1242 = vmatprep.subr.mxu0 0.0
    %1243 = vmatpush1.msra.mxu0 0.0
    %1244 = vmatprep.subr.mxu0 0.0
    %1245 = vmatpush1.msra.mxu0 0.0
    %1246 = vmatprep.subr.mxu0 0.0
    %1247 = vmatpush1.msra.mxu0 0.0
    %1248 = vmatprep.subr.mxu0 0.0
    %1249 = vmatpush1.msra.mxu0 0.0
    %1250 = vmatprep.subr.mxu0 0.0
    %1251 = vmatpush1.msra.mxu0 0.0
    %1252 = vmatprep.subr.mxu0 0.0
    %1253 = vmatpush1.msra.mxu0 %v187
    %1254 = vmatprep.subr.mxu0 0.0
    %1255 = vmatpush1.msra.mxu0 %v186
    %1256 = vmatprep.subr.mxu0 0.0
    %1257 = vmatpush1.msra.mxu0 %v185
    %1258 = vmatprep.subr.mxu0 0.0
    %1259 = vmatpush1.msra.mxu0 %v184
    %1260 = vmatprep.subr.mxu0 0.0
    %1261 = vmatpush2.msra.mxu0 0.0
    %1262 = vmatprep.subr.mxu0 0.0
    %1263 = vmatpush2.msra.mxu0 0.0
    %1264 = vmatprep.subr.mxu0 0.0
    %1265 = vmatpush2.msra.mxu0 0.0
    %1266 = vmatprep.subr.mxu0 0.0
    %1267 = vmatpush2.msra.mxu0 0.0
    %1268 = vmatprep.subr.mxu0 0.0
    %1269 = vmatpush2.msra.mxu0 0.0
    %1270 = vmatprep.subr.mxu0 0.0
    %1271 = vmatpush2.msra.mxu0 0.0
    %1272 = vmatprep.subr.mxu0 0.0
    %1273 = vmatpush2.msra.mxu0 0.0
    %1274 = vmatprep.subr.mxu0 0.0
    %1275 = vmatpush2.msra.mxu0 0.0
    %1276 = vmatprep.subr.mxu0 0.0
    %1277 = vmatpush2.msra.mxu0 0.0
    %1278 = vmatprep.subr.mxu0 0.0
    %1279 = vmatpush2.msra.mxu0 0.0
    %1280 = vmatprep.subr.mxu0 0.0
    %1281 = vmatpush2.msra.mxu0 0.0
    %1282 = vmatprep.subr.mxu0 0.0
    %1283 = vmatpush2.msra.mxu0 0.0
    %1284 = vmatprep.subr.mxu0 0.0
    %1285 = vmatpush2.msra.mxu0 0.0
    %1286 = vmatprep.subr.mxu0 0.0
    %1287 = vmatpush2.msra.mxu0 0.0
    %1288 = vmatprep.subr.mxu0 0.0
    %1289 = vmatpush2.msra.mxu0 0.0
    %1290 = vmatprep.subr.mxu0 0.0
    %1291 = vmatpush2.msra.mxu0 0.0
    %1292 = vmatprep.mubr.f32.mxu0 0.0
    %1293 = vmatmul.mubr.f32.gmra.mxu0 %v1226
    %v1294 = vpop.f32.mrf.mxu0
    %v1295 = vadd.f32 %v1222, %v1294
    %v1296 = vpop.f32.mrf.mxu0
    %1297 = vdwg.mxu0
    %v1298 = vadd.f32 %v1295, %v197
    %v1299 = vtanh.pop %v1298
    %1300 = vmatprep.subr.mxu0 0.0
    %1301 = vmatpush1.msra.mxu0 0.0
    %1302 = vmatprep.subr.mxu0 0.0
    %1303 = vmatpush1.msra.mxu0 0.0
    %1304 = vmatprep.subr.mxu0 0.0
    %1305 = vmatpush1.msra.mxu0 0.0
    %1306 = vmatprep.subr.mxu0 0.0
    %1307 = vmatpush1.msra.mxu0 0.0
    %1308 = vmatprep.subr.mxu0 0.0
    %1309 = vmatpush1.msra.mxu0 0.0
    %1310 = vmatprep.subr.mxu0 0.0
    %1311 = vmatpush1.msra.mxu0 0.0
    %1312 = vmatprep.subr.mxu0 0.0
    %1313 = vmatpush1.msra.mxu0 0.0
    %1314 = vmatprep.subr.mxu0 0.0
    %1315 = vmatpush1.msra.mxu0 0.0
    %1316 = vmatprep.subr.mxu0 0.0
    %1317 = vmatpush1.msra.mxu0 0.0
    %1318 = vmatprep.subr.mxu0 0.0
    %1319 = vmatpush1.msra.mxu0 0.0
    %1320 = vmatprep.subr.mxu0 0.0
    %1321 = vmatpush1.msra.mxu0 0.0
    %1322 = vmatprep.subr.mxu0 0.0
    %1323 = vmatpush1.msra.mxu0 0.0
    %1324 = vmatprep.subr.mxu0 0.0
    %1325 = vmatpush1.msra.mxu0 %v183
    %1326 = vmatprep.subr.mxu0 0.0
    %1327 = vmatpush1.msra.mxu0 %v182
    %1328 = vmatprep.subr.mxu0 0.0
    %1329 = vmatpush1.msra.mxu0 %v181
    %1330 = vmatprep.subr.mxu0 0.0
    %1331 = vmatpush1.msra.mxu0 %v180
    %1332 = vmatprep.subr.mxu0 0.0
    %1333 = vmatpush2.msra.mxu0 0.0
    %1334 = vmatprep.subr.mxu0 0.0
    %1335 = vmatpush2.msra.mxu0 0.0
    %1336 = vmatprep.subr.mxu0 0.0
    %1337 = vmatpush2.msra.mxu0 0.0
    %1338 = vmatprep.subr.mxu0 0.0
    %1339 = vmatpush2.msra.mxu0 0.0
    %1340 = vmatprep.subr.mxu0 0.0
    %1341 = vmatpush2.msra.mxu0 0.0
    %1342 = vmatprep.subr.mxu0 0.0
    %1343 = vmatpush2.msra.mxu0 0.0
    %1344 = vmatprep.subr.mxu0 0.0
    %1345 = vmatpush2.msra.mxu0 0.0
    %1346 = vmatprep.subr.mxu0 0.0
    %1347 = vmatpush2.msra.mxu0 0.0
    %1348 = vmatprep.subr.mxu0 0.0
    %1349 = vmatpush2.msra.mxu0 0.0
    %1350 = vmatprep.subr.mxu0 0.0
    %1351 = vmatpush2.msra.mxu0 0.0
    %1352 = vmatprep.subr.mxu0 0.0
    %1353 = vmatpush2.msra.mxu0 0.0
    %1354 = vmatprep.subr.mxu0 0.0
    %1355 = vmatpush2.msra.mxu0 0.0
    %1356 = vmatprep.subr.mxu0 0.0
    %1357 = vmatpush2.msra.mxu0 0.0
    %1358 = vmatprep.subr.mxu0 0.0
    %1359 = vmatpush2.msra.mxu0 0.0
    %1360 = vmatprep.subr.mxu0 0.0
    %1361 = vmatpush2.msra.mxu0 0.0
    %1362 = vmatprep.subr.mxu0 0.0
    %1363 = vmatpush2.msra.mxu0 0.0
    %1364 = vmatprep.mubr.f32.mxu0 0.0
    %1365 = vmatmul.mubr.f32.gmra.mxu0 %v1226
    %v1366 = vpop.f32.mrf.mxu0
    %v1367 = vadd.f32 0.0, %v1366
    %v1368 = vpop.f32.mrf.mxu0
    %1369 = vdwg.mxu0
    %v1370 = vadd.f32 %v167, %v1367
    %v1371 = vtanh.pop %v1370
    %v1373 = vsel %vm199, %v1299, 0
    %1375 = vmatprep.subr.mxu0 0.0
    %1376 = vmatpush1.msra.mxu0 0.0
    %1377 = vmatprep.subr.mxu0 0.0
    %1378 = vmatpush1.msra.mxu0 0.0
    %1379 = vmatprep.subr.mxu0 0.0
    %1380 = vmatpush1.msra.mxu0 0.0
    %1381 = vmatprep.subr.mxu0 0.0
    %1382 = vmatpush1.msra.mxu0 0.0
    %1383 = vmatprep.subr.mxu0 0.0
    %1384 = vmatpush1.msra.mxu0 0.0
    %1385 = vmatprep.subr.mxu0 0.0
    %1386 = vmatpush1.msra.mxu0 0.0
    %1387 = vmatprep.subr.mxu0 0.0
    %1388 = vmatpush1.msra.mxu0 0.0
    %1389 = vmatprep.subr.mxu0 0.0
    %1390 = vmatpush1.msra.mxu0 0.0
    %1391 = vmatprep.subr.mxu0 0.0
    %1392 = vmatpush1.msra.mxu0 0.0
    %1393 = vmatprep.subr.mxu0 0.0
    %1394 = vmatpush1.msra.mxu0 0.0
    %1395 = vmatprep.subr.mxu0 0.0
    %1396 = vmatpush1.msra.mxu0 0.0
    %1397 = vmatprep.subr.mxu0 0.0
    %1398 = vmatpush1.msra.mxu0 0.0
    %1399 = vmatprep.subr.mxu0 0.0
    %1400 = vmatpush1.msra.mxu0 %v191
    %1401 = vmatprep.subr.mxu0 0.0
    %1402 = vmatpush1.msra.mxu0 %v190
    %1403 = vmatprep.subr.mxu0 0.0
    %1404 = vmatpush1.msra.mxu0 %v189
    %1405 = vmatprep.subr.mxu0 0.0
    %1406 = vmatpush1.msra.mxu0 %v188
    %1407 = vmatprep.subr.mxu0 0.0
    %1408 = vmatpush2.msra.mxu0 0.0
    %1409 = vmatprep.subr.mxu0 0.0
    %1410 = vmatpush2.msra.mxu0 0.0
    %1411 = vmatprep.subr.mxu0 0.0
    %1412 = vmatpush2.msra.mxu0 0.0
    %1413 = vmatprep.subr.mxu0 0.0
    %1414 = vmatpush2.msra.mxu0 0.0
    %1415 = vmatprep.subr.mxu0 0.0
    %1416 = vmatpush2.msra.mxu0 0.0
    %1417 = vmatprep.subr.mxu0 0.0
    %1418 = vmatpush2.msra.mxu0 0.0
    %1419 = vmatprep.subr.mxu0 0.0
    %1420 = vmatpush2.msra.mxu0 0.0
    %1421 = vmatprep.subr.mxu0 0.0
    %1422 = vmatpush2.msra.mxu0 0.0
    %1423 = vmatprep.subr.mxu0 0.0
    %1424 = vmatpush2.msra.mxu0 0.0
    %1425 = vmatprep.subr.mxu0 0.0
    %1426 = vmatpush2.msra.mxu0 0.0
    %1427 = vmatprep.subr.mxu0 0.0
    %1428 = vmatpush2.msra.mxu0 0.0
    %1429 = vmatprep.subr.mxu0 0.0
    %1430 = vmatpush2.msra.mxu0 0.0
    %1431 = vmatprep.subr.mxu0 0.0
    %1432 = vmatpush2.msra.mxu0 0.0
    %1433 = vmatprep.subr.mxu0 0.0
    %1434 = vmatpush2.msra.mxu0 0.0
    %1435 = vmatprep.subr.mxu0 0.0
    %1436 = vmatpush2.msra.mxu0 0.0
    %1437 = vmatprep.subr.mxu0 0.0
    %1438 = vmatpush2.msra.mxu0 0.0
    %1439 = vmatprep.mubr.f32.mxu0 0.0
    %1440 = vmatmul.mubr.f32.gmra.mxu0 %v1373
    %v1441 = vpop.f32.mrf.mxu0
    %v1442 = vadd.f32 0.0, %v1441
    %v1443 = vpop.f32.mrf.mxu0
    %1444 = vdwg.mxu0
    %v1446 = vsel %vm199, %v1371, 0
    %1448 = vmatprep.subr.mxu0 0.0
    %1449 = vmatpush1.msra.mxu0 0.0
    %1450 = vmatprep.subr.mxu0 0.0
    %1451 = vmatpush1.msra.mxu0 0.0
    %1452 = vmatprep.subr.mxu0 0.0
    %1453 = vmatpush1.msra.mxu0 0.0
    %1454 = vmatprep.subr.mxu0 0.0
    %1455 = vmatpush1.msra.mxu0 0.0
    %1456 = vmatprep.subr.mxu0 0.0
    %1457 = vmatpush1.msra.mxu0 0.0
    %1458 = vmatprep.subr.mxu0 0.0
    %1459 = vmatpush1.msra.mxu0 0.0
    %1460 = vmatprep.subr.mxu0 0.0
    %1461 = vmatpush1.msra.mxu0 0.0
    %1462 = vmatprep.subr.mxu0 0.0
    %1463 = vmatpush1.msra.mxu0 0.0
    %1464 = vmatprep.subr.mxu0 0.0
    %1465 = vmatpush1.msra.mxu0 0.0
    %1466 = vmatprep.subr.mxu0 0.0
    %1467 = vmatpush1.msra.mxu0 0.0
    %1468 = vmatprep.subr.mxu0 0.0
    %1469 = vmatpush1.msra.mxu0 0.0
    %1470 = vmatprep.subr.mxu0 0.0
    %1471 = vmatpush1.msra.mxu0 0.0
    %1472 = vmatprep.subr.mxu0 0.0
    %1473 = vmatpush1.msra.mxu0 %v187
    %1474 = vmatprep.subr.mxu0 0.0
    %1475 = vmatpush1.msra.mxu0 %v186
    %1476 = vmatprep.subr.mxu0 0.0
    %1477 = vmatpush1.msra.mxu0 %v185
    %1478 = vmatprep.subr.mxu0 0.0
    %1479 = vmatpush1.msra.mxu0 %v184
    %1480 = vmatprep.subr.mxu0 0.0
    %1481 = vmatpush2.msra.mxu0 0.0
    %1482 = vmatprep.subr.mxu0 0.0
    %1483 = vmatpush2.msra.mxu0 0.0
    %1484 = vmatprep.subr.mxu0 0.0
    %1485 = vmatpush2.msra.mxu0 0.0
    %1486 = vmatprep.subr.mxu0 0.0
    %1487 = vmatpush2.msra.mxu0 0.0
    %1488 = vmatprep.subr.mxu0 0.0
    %1489 = vmatpush2.msra.mxu0 0.0
    %1490 = vmatprep.subr.mxu0 0.0
    %1491 = vmatpush2.msra.mxu0 0.0
    %1492 = vmatprep.subr.mxu0 0.0
    %1493 = vmatpush2.msra.mxu0 0.0
    %1494 = vmatprep.subr.mxu0 0.0
    %1495 = vmatpush2.msra.mxu0 0.0
    %1496 = vmatprep.subr.mxu0 0.0
    %1497 = vmatpush2.msra.mxu0 0.0
    %1498 = vmatprep.subr.mxu0 0.0
    %1499 = vmatpush2.msra.mxu0 0.0
    %1500 = vmatprep.subr.mxu0 0.0
    %1501 = vmatpush2.msra.mxu0 0.0
    %1502 = vmatprep.subr.mxu0 0.0
    %1503 = vmatpush2.msra.mxu0 0.0
    %1504 = vmatprep.subr.mxu0 0.0
    %1505 = vmatpush2.msra.mxu0 0.0
    %1506 = vmatprep.subr.mxu0 0.0
    %1507 = vmatpush2.msra.mxu0 0.0
    %1508 = vmatprep.subr.mxu0 0.0
    %1509 = vmatpush2.msra.mxu0 0.0
    %1510 = vmatprep.subr.mxu0 0.0
    %1511 = vmatpush2.msra.mxu0 0.0
    %1512 = vmatprep.mubr.f32.mxu0 0.0
    %1513 = vmatmul.mubr.f32.gmra.mxu0 %v1446
    %v1514 = vpop.f32.mrf.mxu0
    %v1515 = vadd.f32 %v1442, %v1514
    %v1516 = vpop.f32.mrf.mxu0
    %1517 = vdwg.mxu0
    %v1518 = vadd.f32 %v1515, %v197
    %v1519 = vtanh.pop %v1518
    %1520 = vmatprep.subr.mxu0 0.0
    %1521 = vmatpush1.msra.mxu0 0.0
    %1522 = vmatprep.subr.mxu0 0.0
    %1523 = vmatpush1.msra.mxu0 0.0
    %1524 = vmatprep.subr.mxu0 0.0
    %1525 = vmatpush1.msra.mxu0 0.0
    %1526 = vmatprep.subr.mxu0 0.0
    %1527 = vmatpush1.msra.mxu0 0.0
    %1528 = vmatprep.subr.mxu0 0.0
    %1529 = vmatpush1.msra.mxu0 0.0
    %1530 = vmatprep.subr.mxu0 0.0
    %1531 = vmatpush1.msra.mxu0 0.0
    %1532 = vmatprep.subr.mxu0 0.0
    %1533 = vmatpush1.msra.mxu0 0.0
    %1534 = vmatprep.subr.mxu0 0.0
    %1535 = vmatpush1.msra.mxu0 0.0
    %1536 = vmatprep.subr.mxu0 0.0
    %1537 = vmatpush1.msra.mxu0 0.0
    %1538 = vmatprep.subr.mxu0 0.0
    %1539 = vmatpush1.msra.mxu0 0.0
    %1540 = vmatprep.subr.mxu0 0.0
    %1541 = vmatpush1.msra.mxu0 0.0
    %1542 = vmatprep.subr.mxu0 0.0
    %1543 = vmatpush1.msra.mxu0 0.0
    %1544 = vmatprep.subr.mxu0 0.0
    %1545 = vmatpush1.msra.mxu0 %v183
    %1546 = vmatprep.subr.mxu0 0.0
    %1547 = vmatpush1.msra.mxu0 %v182
    %1548 = vmatprep.subr.mxu0 0.0
    %1549 = vmatpush1.msra.mxu0 %v181
    %1550 = vmatprep.subr.mxu0 0.0
    %1551 = vmatpush1.msra.mxu0 %v180
    %1552 = vmatprep.subr.mxu0 0.0
    %1553 = vmatpush2.msra.mxu0 0.0
    %1554 = vmatprep.subr.mxu0 0.0
    %1555 = vmatpush2.msra.mxu0 0.0
    %1556 = vmatprep.subr.mxu0 0.0
    %1557 = vmatpush2.msra.mxu0 0.0
    %1558 = vmatprep.subr.mxu0 0.0
    %1559 = vmatpush2.msra.mxu0 0.0
    %1560 = vmatprep.subr.mxu0 0.0
    %1561 = vmatpush2.msra.mxu0 0.0
    %1562 = vmatprep.subr.mxu0 0.0
    %1563 = vmatpush2.msra.mxu0 0.0
    %1564 = vmatprep.subr.mxu0 0.0
    %1565 = vmatpush2.msra.mxu0 0.0
    %1566 = vmatprep.subr.mxu0 0.0
    %1567 = vmatpush2.msra.mxu0 0.0
    %1568 = vmatprep.subr.mxu0 0.0
    %1569 = vmatpush2.msra.mxu0 0.0
    %1570 = vmatprep.subr.mxu0 0.0
    %1571 = vmatpush2.msra.mxu0 0.0
    %1572 = vmatprep.subr.mxu0 0.0
    %1573 = vmatpush2.msra.mxu0 0.0
    %1574 = vmatprep.subr.mxu0 0.0
    %1575 = vmatpush2.msra.mxu0 0.0
    %1576 = vmatprep.subr.mxu0 0.0
    %1577 = vmatpush2.msra.mxu0 0.0
    %1578 = vmatprep.subr.mxu0 0.0
    %1579 = vmatpush2.msra.mxu0 0.0
    %1580 = vmatprep.subr.mxu0 0.0
    %1581 = vmatpush2.msra.mxu0 0.0
    %1582 = vmatprep.subr.mxu0 0.0
    %1583 = vmatpush2.msra.mxu0 0.0
    %1584 = vmatprep.mubr.f32.mxu0 0.0
    %1585 = vmatmul.mubr.f32.gmra.mxu0 %v1446
    %v1586 = vpop.f32.mrf.mxu0
    %v1587 = vadd.f32 0.0, %v1586
    %v1588 = vpop.f32.mrf.mxu0
    %1589 = vdwg.mxu0
    %v1590 = vadd.f32 %v172, %v1587
    %v1591 = vtanh.pop %v1590
    %v1593 = vsel %vm199, %v1519, 0
    %1595 = vmatprep.subr.mxu0 0.0
    %1596 = vmatpush1.msra.mxu0 0.0
    %1597 = vmatprep.subr.mxu0 0.0
    %1598 = vmatpush1.msra.mxu0 0.0
    %1599 = vmatprep.subr.mxu0 0.0
    %1600 = vmatpush1.msra.mxu0 0.0
    %1601 = vmatprep.subr.mxu0 0.0
    %1602 = vmatpush1.msra.mxu0 0.0
    %1603 = vmatprep.subr.mxu0 0.0
    %1604 = vmatpush1.msra.mxu0 0.0
    %1605 = vmatprep.subr.mxu0 0.0
    %1606 = vmatpush1.msra.mxu0 0.0
    %1607 = vmatprep.subr.mxu0 0.0
    %1608 = vmatpush1.msra.mxu0 0.0
    %1609 = vmatprep.subr.mxu0 0.0
    %1610 = vmatpush1.msra.mxu0 0.0
    %1611 = vmatprep.subr.mxu0 0.0
    %1612 = vmatpush1.msra.mxu0 0.0
    %1613 = vmatprep.subr.mxu0 0.0
    %1614 = vmatpush1.msra.mxu0 0.0
    %1615 = vmatprep.subr.mxu0 0.0
    %1616 = vmatpush1.msra.mxu0 0.0
    %1617 = vmatprep.subr.mxu0 0.0
    %1618 = vmatpush1.msra.mxu0 0.0
    %1619 = vmatprep.subr.mxu0 0.0
    %1620 = vmatpush1.msra.mxu0 %v191
    %1621 = vmatprep.subr.mxu0 0.0
    %1622 = vmatpush1.msra.mxu0 %v190
    %1623 = vmatprep.subr.mxu0 0.0
    %1624 = vmatpush1.msra.mxu0 %v189
    %1625 = vmatprep.subr.mxu0 0.0
    %1626 = vmatpush1.msra.mxu0 %v188
    %1627 = vmatprep.subr.mxu0 0.0
    %1628 = vmatpush2.msra.mxu0 0.0
    %1629 = vmatprep.subr.mxu0 0.0
    %1630 = vmatpush2.msra.mxu0 0.0
    %1631 = vmatprep.subr.mxu0 0.0
    %1632 = vmatpush2.msra.mxu0 0.0
    %1633 = vmatprep.subr.mxu0 0.0
    %1634 = vmatpush2.msra.mxu0 0.0
    %1635 = vmatprep.subr.mxu0 0.0
    %1636 = vmatpush2.msra.mxu0 0.0
    %1637 = vmatprep.subr.mxu0 0.0
    %1638 = vmatpush2.msra.mxu0 0.0
    %1639 = vmatprep.subr.mxu0 0.0
    %1640 = vmatpush2.msra.mxu0 0.0
    %1641 = vmatprep.subr.mxu0 0.0
    %1642 = vmatpush2.msra.mxu0 0.0
    %1643 = vmatprep.subr.mxu0 0.0
    %1644 = vmatpush2.msra.mxu0 0.0
    %1645 = vmatprep.subr.mxu0 0.0
    %1646 = vmatpush2.msra.mxu0 0.0
    %1647 = vmatprep.subr.mxu0 0.0
    %1648 = vmatpush2.msra.mxu0 0.0
    %1649 = vmatprep.subr.mxu0 0.0
    %1650 = vmatpush2.msra.mxu0 0.0
    %1651 = vmatprep.subr.mxu0 0.0
    %1652 = vmatpush2.msra.mxu0 0.0
    %1653 = vmatprep.subr.mxu0 0.0
    %1654 = vmatpush2.msra.mxu0 0.0
    %1655 = vmatprep.subr.mxu0 0.0
    %1656 = vmatpush2.msra.mxu0 0.0
    %1657 = vmatprep.subr.mxu0 0.0
    %1658 = vmatpush2.msra.mxu0 0.0
    %1659 = vmatprep.mubr.f32.mxu0 0.0
    %1660 = vmatmul.mubr.f32.gmra.mxu0 %v1593
    %v1661 = vpop.f32.mrf.mxu0
    %v1662 = vadd.f32 0.0, %v1661
    %v1663 = vpop.f32.mrf.mxu0
    %1664 = vdwg.mxu0
    %v1666 = vsel %vm199, %v1591, 0
    %1668 = vmatprep.subr.mxu0 0.0
    %1669 = vmatpush1.msra.mxu0 0.0
    %1670 = vmatprep.subr.mxu0 0.0
    %1671 = vmatpush1.msra.mxu0 0.0
    %1672 = vmatprep.subr.mxu0 0.0
    %1673 = vmatpush1.msra.mxu0 0.0
    %1674 = vmatprep.subr.mxu0 0.0
    %1675 = vmatpush1.msra.mxu0 0.0
    %1676 = vmatprep.subr.mxu0 0.0
    %1677 = vmatpush1.msra.mxu0 0.0
    %1678 = vmatprep.subr.mxu0 0.0
    %1679 = vmatpush1.msra.mxu0 0.0
    %1680 = vmatprep.subr.mxu0 0.0
    %1681 = vmatpush1.msra.mxu0 0.0
    %1682 = vmatprep.subr.mxu0 0.0
    %1683 = vmatpush1.msra.mxu0 0.0
    %1684 = vmatprep.subr.mxu0 0.0
    %1685 = vmatpush1.msra.mxu0 0.0
    %1686 = vmatprep.subr.mxu0 0.0
    %1687 = vmatpush1.msra.mxu0 0.0
    %1688 = vmatprep.subr.mxu0 0.0
    %1689 = vmatpush1.msra.mxu0 0.0
    %1690 = vmatprep.subr.mxu0 0.0
    %1691 = vmatpush1.msra.mxu0 0.0
    %1692 = vmatprep.subr.mxu0 0.0
    %1693 = vmatpush1.msra.mxu0 %v187
    %1694 = vmatprep.subr.mxu0 0.0
    %1695 = vmatpush1.msra.mxu0 %v186
    %1696 = vmatprep.subr.mxu0 0.0
    %1697 = vmatpush1.msra.mxu0 %v185
    %1698 = vmatprep.subr.mxu0 0.0
    %1699 = vmatpush1.msra.mxu0 %v184
    %1700 = vmatprep.subr.mxu0 0.0
    %1701 = vmatpush2.msra.mxu0 0.0
    %1702 = vmatprep.subr.mxu0 0.0
    %1703 = vmatpush2.msra.mxu0 0.0
    %1704 = vmatprep.subr.mxu0 0.0
    %1705 = vmatpush2.msra.mxu0 0.0
    %1706 = vmatprep.subr.mxu0 0.0
    %1707 = vmatpush2.msra.mxu0 0.0
    %1708 = vmatprep.subr.mxu0 0.0
    %1709 = vmatpush2.msra.mxu0 0.0
    %1710 = vmatprep.subr.mxu0 0.0
    %1711 = vmatpush2.msra.mxu0 0.0
    %1712 = vmatprep.subr.mxu0 0.0
    %1713 = vmatpush2.msra.mxu0 0.0
    %1714 = vmatprep.subr.mxu0 0.0
    %1715 = vmatpush2.msra.mxu0 0.0
    %1716 = vmatprep.subr.mxu0 0.0
    %1717 = vmatpush2.msra.mxu0 0.0
    %1718 = vmatprep.subr.mxu0 0.0
    %1719 = vmatpush2.msra.mxu0 0.0
    %1720 = vmatprep.subr.mxu0 0.0
    %1721 = vmatpush2.msra.mxu0 0.0
    %1722 = vmatprep.subr.mxu0 0.0
    %1723 = vmatpush2.msra.mxu0 0.0
    %1724 = vmatprep.subr.mxu0 0.0
    %1725 = vmatpush2.msra.mxu0 0.0
    %1726 = vmatprep.subr.mxu0 0.0
    %1727 = vmatpush2.msra.mxu0 0.0
    %1728 = vmatprep.subr.mxu0 0.0
    %1729 = vmatpush2.msra.mxu0 0.0
    %1730 = vmatprep.subr.mxu0 0.0
    %1731 = vmatpush2.msra.mxu0 0.0
    %1732 = vmatprep.mubr.f32.mxu0 0.0
    %1733 = vmatmul.mubr.f32.gmra.mxu0 %v1666
    %v1734 = vpop.f32.mrf.mxu0
    %v1735 = vadd.f32 %v1662, %v1734
    %v1736 = vpop.f32.mrf.mxu0
    %1737 = vdwg.mxu0
    %v1738 = vadd.f32 %v1735, %v197
    %v1739 = vtanh.pop %v1738
    %1740 = vmatprep.subr.mxu0 0.0
    %1741 = vmatpush1.msra.mxu0 0.0
    %1742 = vmatprep.subr.mxu0 0.0
    %1743 = vmatpush1.msra.mxu0 0.0
    %1744 = vmatprep.subr.mxu0 0.0
    %1745 = vmatpush1.msra.mxu0 0.0
    %1746 = vmatprep.subr.mxu0 0.0
    %1747 = vmatpush1.msra.mxu0 0.0
    %1748 = vmatprep.subr.mxu0 0.0
    %1749 = vmatpush1.msra.mxu0 0.0
    %1750 = vmatprep.subr.mxu0 0.0
    %1751 = vmatpush1.msra.mxu0 0.0
    %1752 = vmatprep.subr.mxu0 0.0
    %1753 = vmatpush1.msra.mxu0 0.0
    %1754 = vmatprep.subr.mxu0 0.0
    %1755 = vmatpush1.msra.mxu0 0.0
    %1756 = vmatprep.subr.mxu0 0.0
    %1757 = vmatpush1.msra.mxu0 0.0
    %1758 = vmatprep.subr.mxu0 0.0
    %1759 = vmatpush1.msra.mxu0 0.0
    %1760 = vmatprep.subr.mxu0 0.0
    %1761 = vmatpush1.msra.mxu0 0.0
    %1762 = vmatprep.subr.mxu0 0.0
    %1763 = vmatpush1.msra.mxu0 0.0
    %1764 = vmatprep.subr.mxu0 0.0
    %1765 = vmatpush1.msra.mxu0 %v183
    %1766 = vmatprep.subr.mxu0 0.0
    %1767 = vmatpush1.msra.mxu0 %v182
    %1768 = vmatprep.subr.mxu0 0.0
    %1769 = vmatpush1.msra.mxu0 %v181
    %1770 = vmatprep.subr.mxu0 0.0
    %1771 = vmatpush1.msra.mxu0 %v180
    %1772 = vmatprep.subr.mxu0 0.0
    %1773 = vmatpush2.msra.mxu0 0.0
    %1774 = vmatprep.subr.mxu0 0.0
    %1775 = vmatpush2.msra.mxu0 0.0
    %1776 = vmatprep.subr.mxu0 0.0
    %1777 = vmatpush2.msra.mxu0 0.0
    %1778 = vmatprep.subr.mxu0 0.0
    %1779 = vmatpush2.msra.mxu0 0.0
    %1780 = vmatprep.subr.mxu0 0.0
    %1781 = vmatpush2.msra.mxu0 0.0
    %1782 = vmatprep.subr.mxu0 0.0
    %1783 = vmatpush2.msra.mxu0 0.0
    %1784 = vmatprep.subr.mxu0 0.0
    %1785 = vmatpush2.msra.mxu0 0.0
    %1786 = vmatprep.subr.mxu0 0.0
    %1787 = vmatpush2.msra.mxu0 0.0
    %1788 = vmatprep.subr.mxu0 0.0
    %1789 = vmatpush2.msra.mxu0 0.0
    %1790 = vmatprep.subr.mxu0 0.0
    %1791 = vmatpush2.msra.mxu0 0.0
    %1792 = vmatprep.subr.mxu0 0.0
    %1793 = vmatpush2.msra.mxu0 0.0
    %1794 = vmatprep.subr.mxu0 0.0
    %1795 = vmatpush2.msra.mxu0 0.0
    %1796 = vmatprep.subr.mxu0 0.0
    %1797 = vmatpush2.msra.mxu0 0.0
    %1798 = vmatprep.subr.mxu0 0.0
    %1799 = vmatpush2.msra.mxu0 0.0
    %1800 = vmatprep.subr.mxu0 0.0
    %1801 = vmatpush2.msra.mxu0 0.0
    %1802 = vmatprep.subr.mxu0 0.0
    %1803 = vmatpush2.msra.mxu0 0.0
    %1804 = vmatprep.mubr.f32.mxu0 0.0
    %1805 = vmatmul.mubr.f32.gmra.mxu0 %v1666
    %v1806 = vpop.f32.mrf.mxu0
    %v1807 = vadd.f32 0.0, %v1806
    %v1808 = vpop.f32.mrf.mxu0
    %1809 = vdwg.mxu0
    %v1810 = vadd.f32 %v177, %v1807
    %v1811 = vtanh.pop %v1810
    %v1813 = vsel %vm199, %v1739, 0
    %1815 = vmatprep.subr.mxu0 0.0
    %1816 = vmatpush1.msra.mxu0 0.0
    %1817 = vmatprep.subr.mxu0 0.0
    %1818 = vmatpush1.msra.mxu0 0.0
    %1819 = vmatprep.subr.mxu0 0.0
    %1820 = vmatpush1.msra.mxu0 0.0
    %1821 = vmatprep.subr.mxu0 0.0
    %1822 = vmatpush1.msra.mxu0 0.0
    %1823 = vmatprep.subr.mxu0 0.0
    %1824 = vmatpush1.msra.mxu0 0.0
    %1825 = vmatprep.subr.mxu0 0.0
    %1826 = vmatpush1.msra.mxu0 0.0
    %1827 = vmatprep.subr.mxu0 0.0
    %1828 = vmatpush1.msra.mxu0 0.0
    %1829 = vmatprep.subr.mxu0 0.0
    %1830 = vmatpush1.msra.mxu0 0.0
    %1831 = vmatprep.subr.mxu0 0.0
    %1832 = vmatpush1.msra.mxu0 0.0
    %1833 = vmatprep.subr.mxu0 0.0
    %1834 = vmatpush1.msra.mxu0 0.0
    %1835 = vmatprep.subr.mxu0 0.0
    %1836 = vmatpush1.msra.mxu0 0.0
    %1837 = vmatprep.subr.mxu0 0.0
    %1838 = vmatpush1.msra.mxu0 0.0
    %1839 = vmatprep.subr.mxu0 0.0
    %1840 = vmatpush1.msra.mxu0 %v191
    %1841 = vmatprep.subr.mxu0 0.0
    %1842 = vmatpush1.msra.mxu0 %v190
    %1843 = vmatprep.subr.mxu0 0.0
    %1844 = vmatpush1.msra.mxu0 %v189
    %1845 = vmatprep.subr.mxu0 0.0
    %1846 = vmatpush1.msra.mxu0 %v188
    %1847 = vmatprep.subr.mxu0 0.0
    %1848 = vmatpush2.msra.mxu0 0.0
    %1849 = vmatprep.subr.mxu0 0.0
    %1850 = vmatpush2.msra.mxu0 0.0
    %1851 = vmatprep.subr.mxu0 0.0
    %1852 = vmatpush2.msra.mxu0 0.0
    %1853 = vmatprep.subr.mxu0 0.0
    %1854 = vmatpush2.msra.mxu0 0.0
    %1855 = vmatprep.subr.mxu0 0.0
    %1856 = vmatpush2.msra.mxu0 0.0
    %1857 = vmatprep.subr.mxu0 0.0
    %1858 = vmatpush2.msra.mxu0 0.0
    %1859 = vmatprep.subr.mxu0 0.0
    %1860 = vmatpush2.msra.mxu0 0.0
    %1861 = vmatprep.subr.mxu0 0.0
    %1862 = vmatpush2.msra.mxu0 0.0
    %1863 = vmatprep.subr.mxu0 0.0
    %1864 = vmatpush2.msra.mxu0 0.0
    %1865 = vmatprep.subr.mxu0 0.0
    %1866 = vmatpush2.msra.mxu0 0.0
    %1867 = vmatprep.subr.mxu0 0.0
    %1868 = vmatpush2.msra.mxu0 0.0
    %1869 = vmatprep.subr.mxu0 0.0
    %1870 = vmatpush2.msra.mxu0 0.0
    %1871 = vmatprep.subr.mxu0 0.0
    %1872 = vmatpush2.msra.mxu0 0.0
    %1873 = vmatprep.subr.mxu0 0.0
    %1874 = vmatpush2.msra.mxu0 0.0
    %1875 = vmatprep.subr.mxu0 0.0
    %1876 = vmatpush2.msra.mxu0 0.0
    %1877 = vmatprep.subr.mxu0 0.0
    %1878 = vmatpush2.msra.mxu0 0.0
    %1879 = vmatprep.mubr.f32.mxu0 0.0
    %1880 = vmatmul.mubr.f32.gmra.mxu0 %v1813
    %v1881 = vpop.f32.mrf.mxu0
    %v1882 = vadd.f32 0.0, %v1881
    %v1883 = vpop.f32.mrf.mxu0
    %1884 = vdwg.mxu0
    %v1886 = vsel %vm199, %v1811, 0
    %1888 = vmatprep.subr.mxu0 0.0
    %1889 = vmatpush1.msra.mxu0 0.0
    %1890 = vmatprep.subr.mxu0 0.0
    %1891 = vmatpush1.msra.mxu0 0.0
    %1892 = vmatprep.subr.mxu0 0.0
    %1893 = vmatpush1.msra.mxu0 0.0
    %1894 = vmatprep.subr.mxu0 0.0
    %1895 = vmatpush1.msra.mxu0 0.0
    %1896 = vmatprep.subr.mxu0 0.0
    %1897 = vmatpush1.msra.mxu0 0.0
    %1898 = vmatprep.subr.mxu0 0.0
    %1899 = vmatpush1.msra.mxu0 0.0
    %1900 = vmatprep.subr.mxu0 0.0
    %1901 = vmatpush1.msra.mxu0 0.0
    %1902 = vmatprep.subr.mxu0 0.0
    %1903 = vmatpush1.msra.mxu0 0.0
    %1904 = vmatprep.subr.mxu0 0.0
    %1905 = vmatpush1.msra.mxu0 0.0
    %1906 = vmatprep.subr.mxu0 0.0
    %1907 = vmatpush1.msra.mxu0 0.0
    %1908 = vmatprep.subr.mxu0 0.0
    %1909 = vmatpush1.msra.mxu0 0.0
    %1910 = vmatprep.subr.mxu0 0.0
    %1911 = vmatpush1.msra.mxu0 0.0
    %1912 = vmatprep.subr.mxu0 0.0
    %1913 = vmatpush1.msra.mxu0 %v187
    %1914 = vmatprep.subr.mxu0 0.0
    %1915 = vmatpush1.msra.mxu0 %v186
    %1916 = vmatprep.subr.mxu0 0.0
    %1917 = vmatpush1.msra.mxu0 %v185
    %1918 = vmatprep.subr.mxu0 0.0
    %1919 = vmatpush1.msra.mxu0 %v184
    %1920 = vmatprep.subr.mxu0 0.0
    %1921 = vmatpush2.msra.mxu0 0.0
    %1922 = vmatprep.subr.mxu0 0.0
    %1923 = vmatpush2.msra.mxu0 0.0
    %1924 = vmatprep.subr.mxu0 0.0
    %1925 = vmatpush2.msra.mxu0 0.0
    %1926 = vmatprep.subr.mxu0 0.0
    %1927 = vmatpush2.msra.mxu0 0.0
    %1928 = vmatprep.subr.mxu0 0.0
    %1929 = vmatpush2.msra.mxu0 0.0
    %1930 = vmatprep.subr.mxu0 0.0
    %1931 = vmatpush2.msra.mxu0 0.0
    %1932 = vmatprep.subr.mxu0 0.0
    %1933 = vmatpush2.msra.mxu0 0.0
    %1934 = vmatprep.subr.mxu0 0.0
    %1935 = vmatpush2.msra.mxu0 0.0
    %1936 = vmatprep.subr.mxu0 0.0
    %1937 = vmatpush2.msra.mxu0 0.0
    %1938 = vmatprep.subr.mxu0 0.0
    %1939 = vmatpush2.msra.mxu0 0.0
    %1940 = vmatprep.subr.mxu0 0.0
    %1941 = vmatpush2.msra.mxu0 0.0
    %1942 = vmatprep.subr.mxu0 0.0
    %1943 = vmatpush2.msra.mxu0 0.0
    %1944 = vmatprep.subr.mxu0 0.0
    %1945 = vmatpush2.msra.mxu0 0.0
    %1946 = vmatprep.subr.mxu0 0.0
    %1947 = vmatpush2.msra.mxu0 0.0
    %1948 = vmatprep.subr.mxu0 0.0
    %1949 = vmatpush2.msra.mxu0 0.0
    %1950 = vmatprep.subr.mxu0 0.0
    %1951 = vmatpush2.msra.mxu0 0.0
    %1952 = vmatprep.mubr.f32.mxu0 0.0
    %1953 = vmatmul.mubr.f32.gmra.mxu0 %v1886
    %v1954 = vpop.f32.mrf.mxu0
    %v1955 = vadd.f32 %v1882, %v1954
    %v1956 = vpop.f32.mrf.mxu0
    %1957 = vdwg.mxu0
    %v1958 = vadd.f32 %v1955, %v197
    %v1959 = vtanh.pop %v1958
    %v1960 = vld [vmem:[%s7] sm:$0xff]
    %v1961 = vld [vmem:[%s7 + $0x8] sm:$0xff]
    %v1962 = vld [vmem:[%s7 + $0x10] sm:$0xff]
    %v1963 = vld [vmem:[%s7 + $0x18] sm:$0xff]
    %v1964 = vld [vmem:[%s8] sm:$0x1]
    %v1966 = vlaneseq
    %v1967 = vshrl.u32 %v1966, 7
    %v1968 = vsub.s32 0, %v1967
    %v1969 = vrot.slane %v1964, %v1968
    %v1972 = vsel %vm199, %v1959, 0
    %1974 = vmatprep.subr.mxu0 0.0
    %1975 = vmatpush1.msra.mxu0 0.0
    %1976 = vmatprep.subr.mxu0 0.0
    %1977 = vmatpush1.msra.mxu0 0.0
    %1978 = vmatprep.subr.mxu0 0.0
    %1979 = vmatpush1.msra.mxu0 0.0
    %1980 = vmatprep.subr.mxu0 0.0
    %1981 = vmatpush1.msra.mxu0 0.0
    %1982 = vmatprep.subr.mxu0 0.0
    %1983 = vmatpush1.msra.mxu0 0.0
    %1984 = vmatprep.subr.mxu0 0.0
    %1985 = vmatpush1.msra.mxu0 0.0
    %1986 = vmatprep.subr.mxu0 0.0
    %1987 = vmatpush1.msra.mxu0 0.0
    %1988 = vmatprep.subr.mxu0 0.0
    %1989 = vmatpush1.msra.mxu0 0.0
    %1990 = vmatprep.subr.mxu0 0.0
    %1991 = vmatpush1.msra.mxu0 0.0
    %1992 = vmatprep.subr.mxu0 0.0
    %1993 = vmatpush1.msra.mxu0 0.0
    %1994 = vmatprep.subr.mxu0 0.0
    %1995 = vmatpush1.msra.mxu0 0.0
    %1996 = vmatprep.subr.mxu0 0.0
    %1997 = vmatpush1.msra.mxu0 0.0
    %1998 = vmatprep.subr.mxu0 0.0
    %1999 = vmatpush1.msra.mxu0 %v1963
    %2000 = vmatprep.subr.mxu0 0.0
    %2001 = vmatpush1.msra.mxu0 %v1962
    %2002 = vmatprep.subr.mxu0 0.0
    %2003 = vmatpush1.msra.mxu0 %v1961
    %2004 = vmatprep.subr.mxu0 0.0
    %2005 = vmatpush1.msra.mxu0 %v1960
    %2006 = vmatprep.subr.mxu0 0.0
    %2007 = vmatpush2.msra.mxu0 0.0
    %2008 = vmatprep.subr.mxu0 0.0
    %2009 = vmatpush2.msra.mxu0 0.0
    %2010 = vmatprep.subr.mxu0 0.0
    %2011 = vmatpush2.msra.mxu0 0.0
    %2012 = vmatprep.subr.mxu0 0.0
    %2013 = vmatpush2.msra.mxu0 0.0
    %2014 = vmatprep.subr.mxu0 0.0
    %2015 = vmatpush2.msra.mxu0 0.0
    %2016 = vmatprep.subr.mxu0 0.0
    %2017 = vmatpush2.msra.mxu0 0.0
    %2018 = vmatprep.subr.mxu0 0.0
    %2019 = vmatpush2.msra.mxu0 0.0
    %2020 = vmatprep.subr.mxu0 0.0
    %2021 = vmatpush2.msra.mxu0 0.0
    %2022 = vmatprep.subr.mxu0 0.0
    %2023 = vmatpush2.msra.mxu0 0.0
    %2024 = vmatprep.subr.mxu0 0.0
    %2025 = vmatpush2.msra.mxu0 0.0
    %2026 = vmatprep.subr.mxu0 0.0
    %2027 = vmatpush2.msra.mxu0 0.0
    %2028 = vmatprep.subr.mxu0 0.0
    %2029 = vmatpush2.msra.mxu0 0.0
    %2030 = vmatprep.subr.mxu0 0.0
    %2031 = vmatpush2.msra.mxu0 0.0
    %2032 = vmatprep.subr.mxu0 0.0
    %2033 = vmatpush2.msra.mxu0 0.0
    %2034 = vmatprep.subr.mxu0 0.0
    %2035 = vmatpush2.msra.mxu0 0.0
    %2036 = vmatprep.subr.mxu0 0.0
    %2037 = vmatpush2.msra.mxu0 0.0
    %2038 = vmatprep.mubr.f32.mxu0 0.0
    %2039 = vmatmul.mubr.f32.gmra.mxu0 %v1972
    %v2040 = vpop.f32.mrf.mxu0
    %v2041 = vadd.f32 %v1969, %v2040
    %v2042 = vpop.f32.mrf.mxu0
    %2043 = vdwg.mxu0
    %vm2044 = vcmask 76800
    %2045 = vst.msk [vmem:[#allocation2] sm:$0xf] %vm2044, %v2041
    // Predicated region
    $region38: #{rnn_forward.1} parent=1 // pred_check
      _
    $region39: #{rnn_forward.1} parent=1 // pred_check_branch
      %2047 = sbr.rel (0) target = $region41
    $region40: #{rnn_forward.1} parent=1 // pred_region
      %s2049 = ssub.s32 64, 64
      %2050 = vsyncadd [#allocation3], %s2049
      %s2052 = sshll.u32 [#allocation2], 4
      %s2053 = int_to_ptr.vmem [resolvable:$true] %s2052
      %2055 = dma.vmem_to_hbm [thread:$0]  %s2053, 64, %s9, [#allocation3]
    $region41: #{rnn_forward.1} parent=1 // pred_fallthru
      _
    // Predicated region
    $region42: #{rnn_forward.1} parent=1 // pred_check
      _
    $region43: #{rnn_forward.1} parent=1 // pred_check_branch
      %2057 = sbr.rel (0) target = $region45
    $region44: #{rnn_forward.1} parent=1 // pred_region
      %2058 = dma.done [#allocation3], 64
    $region45: #{rnn_forward.1} parent=1 // pred_fallthru
      _
    %2059 = vsyncpa [#allocation3], 1

</llo_original>
